<compile_context>
chip_gen: v7x
topology: tpu7x:2x2x1
jax: 0.10.0
libtpu: 0.0.40
codegen_flags: <defaults>
</compile_context>

<pallas_src>
import math

import jax
import jax.numpy as jnp
from jax import lax
from jax.experimental import pallas as pl
from jax.experimental.pallas import tpu as pltpu

LN_EPS = 1e-5


def _layer_norm(x, gamma, beta):
    mu = jnp.mean(x, axis=-1, keepdims=True)
    var = jnp.mean((x - mu) ** 2, axis=-1, keepdims=True)
    return (x - mu) * lax.rsqrt(var + LN_EPS) * gamma + beta


def _pick_batch_block(B, T, batch_block):
    """Largest Bb <= batch_block dividing B with sublane-legal (Bb*T, E) blocks,
    preferring >= 2 grid steps (v7x megacore + pipeline overlap)."""
    legal = [c for c in range(1, B + 1)
             if B % c == 0 and ((c * T) % 8 == 0 or c == B)]
    pref = [c for c in legal if c <= batch_block and B // c >= 2]
    if pref:
        return max(pref)
    small = [c for c in legal if c <= batch_block]
    return max(small) if small else B


def transformer_forward(text_embeds, video_embeds, text_mask, params, *,
                        compute_dtype=jnp.bfloat16, batch_block=4):
    """Fused forward pass of the xpool Transformer block (single head)."""
    B, T, E = text_embeds.shape
    _, F, _ = video_embeds.shape
    out_dtype = text_embeds.dtype
    cd = compute_dtype

    # ---------------- host-side layout preparation ----------------
    # Pad frames to a multiple of 8 (sublane-dense slabs); padded rows never
    # interact with real rows and are sliced off at the end.
    Fp = ((F + 7) // 8) * 8
    if Fp != F:
        video_embeds = jnp.pad(video_embeds, ((0, 0), (0, Fp - F), (0, 0)))

    Bb = _pick_batch_block(B, T, batch_block)
    n_blocks = B // Bb
    rows_t, rows_f = Bb * T, Bb * Fp

    # Flatten (batch, rows) so every grid step works on dense 2-D slabs.
    text2 = text_embeds.reshape(B * T, E)
    video2 = video_embeds.reshape(B * Fp, E)

    # Fold the 1/num_valid_texts normalization into the mask and guard the
    # all-masked case (intentional deviation: 0 instead of the reference NaN).
    valid = jnp.maximum(jnp.sum(text_mask, axis=-1, keepdims=True), 1.0)
    colmask = (text_mask / valid).astype(jnp.float32).reshape(n_blocks, 1, rows_t)

    # Fold the attention scale into the q projection (one-time weight prep);
    # pre-transpose all weights (PyTorch Linear is y = x @ W^T + b) and stack
    # them so they ride in a single, single-buffered DMA.
    scale = 1.0 / math.sqrt(E)                      # single head: head_dim == E
    wstack = jnp.stack([params["wq"].T * scale, params["wk"].T, params["wv"].T,
                        params["wo"].T, params["wl"].T]).astype(cd)   # (5, E, E)
    vecs = jnp.concatenate(
        [params["bq"] * scale, params["bk"], params["bv"], params["bo"],
         params["bl"], params["g1"], params["be1"], params["g2"],
         params["be2"], params["g3"], params["be3"],
         jnp.zeros((5, E), jnp.float32)], axis=0).astype(jnp.float32)  # (16, E)

    def kernel(text_ref, video_ref, cmask_ref, w_ref, vec_ref, out_ref):
        # vec rows: 0 bq 1 bk 2 bv 3 bo 4 bl 5 g1 6 be1 7 g2 8 be2 9 g3 10 be3
        g1, be1 = vec_ref[5:6, :], vec_ref[6:7, :]

        # layer_norm1 (shared params) on both streams; f32 math.
        t = _layer_norm(text_ref[...], g1, be1)                # (rows_t, E) f32
        vd = _layer_norm(video_ref[...], g1, be1)              # (rows_f, E) f32
        tc, vc = t.astype(cd), vd.astype(cd)

        # Projections (weights pre-transposed; q pre-scaled by 1/sqrt(E)).
        q = jnp.dot(tc, w_ref[0], preferred_element_type=jnp.float32) + vec_ref[0:1, :]
        k = jnp.dot(vc, w_ref[1], preferred_element_type=jnp.float32) + vec_ref[1:2, :]
        v = jnp.dot(vc, w_ref[2], preferred_element_type=jnp.float32) + vec_ref[2:3, :]

        # Attention logits for the whole batch block in one MXU call,
        # contracting the embed dim directly (no activation transpose).
        logits = lax.dot_general(
            k.astype(cd), q.astype(cd),
            dimension_numbers=(((1,), (1,)), ((), ())),
            preferred_element_type=jnp.float32)                # (rows_f, rows_t)
        if Bb > 1:
            # Kill cross-batch (frame, text) pairs; generated in-kernel (VPU
            # filler under the MXU) instead of DMA-ing a precomputed mask.
            fb = lax.broadcasted_iota(jnp.int32, (rows_f, rows_t), 0) // Fp
            tb = lax.broadcasted_iota(jnp.int32, (rows_f, rows_t), 1) // T
            logits = jnp.where(fb == tb, logits, jnp.float32(-1e30))

        # Softmax over texts (masked texts still feed the denominator, matching
        # the PyTorch module which applies the mask after softmax).
        logits = logits - jnp.max(logits, axis=-1, keepdims=True)
        p = jnp.exp(logits)
        denom = jnp.sum(p, axis=-1, keepdims=True)
        num = jnp.sum(p * cmask_ref[...], axis=-1, keepdims=True)
        coeff = num * pl.reciprocal(denom, approx=True)        # (rows_f, 1)

        # Single-head pooling: pooled frame row == coeff * v row.
        pooled = v * coeff                                     # (rows_f, E)

        # out_proj -> layer_norm2 -> linear_proj (+ residual) -> layer_norm3.
        o = jnp.dot(pooled.astype(cd), w_ref[3],
                    preferred_element_type=jnp.float32) + vec_ref[3:4, :]
        o = _layer_norm(o, vec_ref[7:8, :], vec_ref[8:9, :])
        # TODO(synk): training-mode dropout not implemented (eval semantics).
        lin = jnp.dot(o.astype(cd), w_ref[4],
                      preferred_element_type=jnp.float32) + vec_ref[4:5, :]
        out = _layer_norm(o + lin, vec_ref[9:10, :], vec_ref[10:11, :])
        out_ref[...] = out.astype(out_ref.dtype)

    def run(single_buffer_consts):
        if single_buffer_consts:
            const = lambda s: pl.BlockSpec(s, lambda i: (0,) * len(s),
                                           pipeline_mode=pl.Buffered(1))
            n_const_buf = 1
        else:
            const = lambda s: pl.BlockSpec(s, lambda i: (0,) * len(s))
            n_const_buf = 2

        # Explicit VMEM budget: 2x activation blocks + weight residency +
        # in-kernel temporaries, 1.5x headroom, clamped to v7x-safe 64 MiB.
        in_item = jnp.dtype(text_embeds.dtype).itemsize
        cd_item = jnp.dtype(cd).itemsize
        act = (rows_t + 2 * rows_f) * E * in_item + rows_t * 4
        consts = 5 * E * E * cd_item + 16 * E * 4
        tmp = 12 * rows_f * max(E, rows_t) * 4 + 2 * rows_f * rows_t * 4
        vmem_limit = int(min(max((2 * act + n_const_buf * consts + tmp) * 3 // 2,
                                 16 << 20), 64 << 20))

        in_specs = [
            pl.BlockSpec((rows_t, E), lambda i: (i, 0)),       # text (flattened)
            pl.BlockSpec((rows_f, E), lambda i: (i, 0)),       # video (flattened)
            pl.BlockSpec((None, 1, rows_t), lambda i: (i, 0, 0)),  # scaled mask
            const((5, E, E)),                                  # stacked weights
            const((16, E)),                                    # biases + LN params
        ]
        return pl.pallas_call(
            kernel,
            out_shape=jax.ShapeDtypeStruct((B * Fp, E), out_dtype),
            grid=(n_blocks,),
            in_specs=in_specs,
            out_specs=pl.BlockSpec((rows_f, E), lambda i: (i, 0)),
            compiler_params=pltpu.CompilerParams(
                dimension_semantics=("parallel",),
                vmem_limit_bytes=vmem_limit),
        )(text2, video2, colmask, wstack, vecs)

    try:
        out2 = run(True)
    except Exception:
        # Fallback for jax versions without BlockSpec(pipeline_mode=...):
        # identical kernel/semantics, default double-buffered constants.
        out2 = run(False)

    return out2.reshape(B, Fp, E)[:, :F, :]


def reference_forward(text_embeds, video_embeds, text_mask, params):
    """Pure-JAX mirror of the PyTorch module (num_heads == 1)."""
    E = text_embeds.shape[-1]

    def ln(x, g, b):
        mu = x.mean(-1, keepdims=True)
        var = ((x - mu) ** 2).mean(-1, keepdims=True)
        return (x - mu) / jnp.sqrt(var + LN_EPS) * g + b

    t = ln(text_embeds, params["g1"], params["be1"])
    vd = ln(video_embeds, params["g1"], params["be1"])
    q = t @ params["wq"].T + params["bq"]
    k = vd @ params["wk"].T + params["bk"]
    v = vd @ params["wv"].T + params["bv"]
    logits = jnp.einsum("bfe,bte->bft", k, q) / math.sqrt(E)
    w = jax.nn.softmax(logits, axis=-1) * text_mask[:, None, :]
    valid = text_mask.sum(-1)[:, None, None]
    pooled = v * (w.sum(-1, keepdims=True) / valid)
    o = ln(pooled @ params["wo"].T + params["bo"], params["g2"], params["be2"])
    lin = o @ params["wl"].T + params["bl"]
    return ln(o + lin, params["g3"], params["be3"])


def make_params(embed_dim, key=None):
    """key=None reproduces Transformer._init_parameters() exactly (identity
    projection weights, zero biases, default LayerNorm affine).  With a key,
    parameters are randomly perturbed so every weight path is exercised."""
    eye = jnp.eye(embed_dim, dtype=jnp.float32)
    zero = jnp.zeros((1, embed_dim), dtype=jnp.float32)
    one = jnp.ones((1, embed_dim), dtype=jnp.float32)
    params = dict(
        wq=eye, bq=zero, wk=eye, bk=zero, wv=eye, bv=zero,
        wo=eye, bo=zero, wl=eye, bl=zero,
        g1=one, be1=zero, g2=one, be2=zero, g3=one, be3=zero,
    )
    if key is not None:
        names = sorted(params)
        keys = jax.random.split(key, len(names))
        for name, k in zip(names, keys):
            params[name] = params[name] + 0.1 * jax.random.normal(
                k, params[name].shape, jnp.float32)
    return params


if __name__ == "__main__":
    B, T, F, E = 2, 8, 6, 32   # batch, num_texts, num_frames, embed_dim (1 head)

    key = jax.random.PRNGKey(0)
    k_text, k_video, k_params = jax.random.split(key, 3)
    text_embeds = jax.random.normal(k_text, (B, T, E), dtype=jnp.float32)
    video_embeds = jax.random.normal(k_video, (B, F, E), dtype=jnp.float32)
    # deterministic mask: first batch has all T texts valid, second only T//2
    lengths = jnp.array([T, T // 2], dtype=jnp.int32)
    text_mask = (jnp.arange(T)[None, :] < lengths[:, None]).astype(jnp.float32)

    # Random perturbation of the identity init exercises every projection path.
    params = make_params(E, key=k_params)
    ref = reference_forward(text_embeds, video_embeds, text_mask, params)

    # f32 matmul path: tight check.
    out_f32 = jax.block_until_ready(
        transformer_forward(text_embeds, video_embeds, text_mask, params,
                            compute_dtype=jnp.float32))
    assert out_f32.shape == (B, F, E)
    err32 = float(jnp.max(jnp.abs(out_f32 - ref)))
    assert jnp.allclose(out_f32, ref, atol=1e-2, rtol=1e-2), (
        f"f32 path mismatch vs reference (max abs err {err32:.2e})")

    # default bf16 matmul path (production): looser tolerance.
    out_bf16 = jax.block_until_ready(
        transformer_forward(text_embeds, video_embeds, text_mask, params))
    assert out_bf16.shape == (B, F, E)
    errbf = float(jnp.max(jnp.abs(out_bf16 - ref)))
    assert jnp.allclose(out_bf16, ref, atol=6e-2, rtol=6e-2), (
        f"bf16 path mismatch vs reference (max abs err {errbf:.2e})")

    print("KERNEL_OK")
</pallas_src>

<mosaic_0001>
module attributes {stable_mosaic.version = 11 : i64} {
  func.func @kernel(%arg0: i32, %arg1: memref<8x32xf32, #tpu.memory_space<vmem>>, %arg2: memref<8x32xf32, #tpu.memory_space<vmem>>, %arg3: memref<1x1x8xf32, #tpu.memory_space<vmem>>, %arg4: memref<5x32x32xf32, #tpu.memory_space<vmem>>, %arg5: memref<16x32xf32, #tpu.memory_space<vmem>>, %arg6: memref<8x32xf32, #tpu.memory_space<vmem>>) attributes {dimension_semantics = [#tpu.dimension_semantics<parallel>], iteration_bounds = array<i64: 2>, scalar_prefetch = 0 : i64, scratch_operands = 0 : i64, tpu.core_type = #tpu.core_type<tc>, window_params = [{transform_indices = @transform_0, window_bounds = array<i64: 8, 32>}, {transform_indices = @transform_1, window_bounds = array<i64: 8, 32>}, {transform_indices = @transform_2, window_bounds = array<i64: 1, 1, 8>}, {pipeline_mode = #tpu.pipeline_mode<synchronous>, transform_indices = @transform_3, window_bounds = array<i64: 5, 32, 32>}, {pipeline_mode = #tpu.pipeline_mode<synchronous>, transform_indices = @transform_4, window_bounds = array<i64: 16, 32>}, {transform_indices = @transform_5, window_bounds = array<i64: 8, 32>}]} {
    %c5 = arith.constant 5 : index
    %c0 = arith.constant 0 : index
    %0 = vector.load %arg5[%c5, %c0] : memref<16x32xf32, #tpu.memory_space<vmem>>, vector<1x32xf32>
    %c6 = arith.constant 6 : index
    %c0_0 = arith.constant 0 : index
    %1 = vector.load %arg5[%c6, %c0_0] : memref<16x32xf32, #tpu.memory_space<vmem>>, vector<1x32xf32>
    %c0_1 = arith.constant 0 : index
    %c0_2 = arith.constant 0 : index
    %2 = vector.load %arg1[%c0_1, %c0_2] : memref<8x32xf32, #tpu.memory_space<vmem>>, vector<8x32xf32>
    %cst = arith.constant dense<0.000000e+00> : vector<8xf32>
    %3 = vector.multi_reduction <add>, %2, %cst [1] : vector<8x32xf32> to vector<8xf32>
    %4 = vector.shape_cast %3 : vector<8xf32> to vector<8x1xf32>
    %cst_3 = arith.constant 3.200000e+01 : f32
    %5 = vector.broadcast %cst_3 : f32 to vector<8x1xf32>
    %6 = arith.divf %4, %5 : vector<8x1xf32>
    %7 = vector.broadcast %6 : vector<8x1xf32> to vector<8x32xf32>
    %8 = arith.subf %2, %7 : vector<8x32xf32>
    %9 = arith.mulf %8, %8 : vector<8x32xf32>
    %cst_4 = arith.constant dense<0.000000e+00> : vector<8xf32>
    %10 = vector.multi_reduction <add>, %9, %cst_4 [1] : vector<8x32xf32> to vector<8xf32>
    %11 = vector.shape_cast %10 : vector<8xf32> to vector<8x1xf32>
    %cst_5 = arith.constant 3.200000e+01 : f32
    %12 = vector.broadcast %cst_5 : f32 to vector<8x1xf32>
    %13 = arith.divf %11, %12 : vector<8x1xf32>
    %14 = vector.broadcast %6 : vector<8x1xf32> to vector<8x32xf32>
    %15 = arith.subf %2, %14 : vector<8x32xf32>
    %cst_6 = arith.constant 9.99999974E-6 : f32
    %16 = vector.broadcast %cst_6 : f32 to vector<8x1xf32>
    %17 = arith.addf %13, %16 : vector<8x1xf32>
    %18 = math.rsqrt %17 : vector<8x1xf32>
    %19 = vector.broadcast %18 : vector<8x1xf32> to vector<8x32xf32>
    %20 = arith.mulf %15, %19 : vector<8x32xf32>
    %21 = vector.broadcast %0 : vector<1x32xf32> to vector<8x32xf32>
    %22 = arith.mulf %20, %21 : vector<8x32xf32>
    %23 = vector.broadcast %1 : vector<1x32xf32> to vector<8x32xf32>
    %24 = arith.addf %22, %23 : vector<8x32xf32>
    %c0_7 = arith.constant 0 : index
    %c0_8 = arith.constant 0 : index
    %25 = vector.load %arg2[%c0_7, %c0_8] : memref<8x32xf32, #tpu.memory_space<vmem>>, vector<8x32xf32>
    %cst_9 = arith.constant dense<0.000000e+00> : vector<8xf32>
    %26 = vector.multi_reduction <add>, %25, %cst_9 [1] : vector<8x32xf32> to vector<8xf32>
    %27 = vector.shape_cast %26 : vector<8xf32> to vector<8x1xf32>
    %cst_10 = arith.constant 3.200000e+01 : f32
    %28 = vector.broadcast %cst_10 : f32 to vector<8x1xf32>
    %29 = arith.divf %27, %28 : vector<8x1xf32>
    %30 = vector.broadcast %29 : vector<8x1xf32> to vector<8x32xf32>
    %31 = arith.subf %25, %30 : vector<8x32xf32>
    %32 = arith.mulf %31, %31 : vector<8x32xf32>
    %cst_11 = arith.constant dense<0.000000e+00> : vector<8xf32>
    %33 = vector.multi_reduction <add>, %32, %cst_11 [1] : vector<8x32xf32> to vector<8xf32>
    %34 = vector.shape_cast %33 : vector<8xf32> to vector<8x1xf32>
    %cst_12 = arith.constant 3.200000e+01 : f32
    %35 = vector.broadcast %cst_12 : f32 to vector<8x1xf32>
    %36 = arith.divf %34, %35 : vector<8x1xf32>
    %37 = vector.broadcast %29 : vector<8x1xf32> to vector<8x32xf32>
    %38 = arith.subf %25, %37 : vector<8x32xf32>
    %cst_13 = arith.constant 9.99999974E-6 : f32
    %39 = vector.broadcast %cst_13 : f32 to vector<8x1xf32>
    %40 = arith.addf %36, %39 : vector<8x1xf32>
    %41 = math.rsqrt %40 : vector<8x1xf32>
    %42 = vector.broadcast %41 : vector<8x1xf32> to vector<8x32xf32>
    %43 = arith.mulf %38, %42 : vector<8x32xf32>
    %44 = vector.broadcast %0 : vector<1x32xf32> to vector<8x32xf32>
    %45 = arith.mulf %43, %44 : vector<8x32xf32>
    %46 = vector.broadcast %1 : vector<1x32xf32> to vector<8x32xf32>
    %47 = arith.addf %45, %46 : vector<8x32xf32>
    %c0_14 = arith.constant 0 : index
    %c0_15 = arith.constant 0 : index
    %c0_16 = arith.constant 0 : index
    %48 = vector.load %arg4[%c0_14, %c0_15, %c0_16] : memref<5x32x32xf32, #tpu.memory_space<vmem>>, vector<1x32x32xf32>
    %49 = vector.shape_cast %48 : vector<1x32x32xf32> to vector<32x32xf32>
    %cst_17 = arith.constant dense<0.000000e+00> : vector<8x32xf32>
    %50 = tpu.matmul %24, %49, %cst_17 {dimension_numbers = #tpu.dot_dimension_numbers<[1], [0], [0], [1], [0, 0, 1, 1], [], []>} : vector<8x32xf32>, vector<32x32xf32>, vector<8x32xf32> -> vector<8x32xf32>
    %c0_18 = arith.constant 0 : index
    %c0_19 = arith.constant 0 : index
    %51 = vector.load %arg5[%c0_18, %c0_19] : memref<16x32xf32, #tpu.memory_space<vmem>>, vector<1x32xf32>
    %52 = vector.broadcast %51 : vector<1x32xf32> to vector<8x32xf32>
    %53 = arith.addf %50, %52 : vector<8x32xf32>
    %c1 = arith.constant 1 : index
    %c0_20 = arith.constant 0 : index
    %c0_21 = arith.constant 0 : index
    %54 = vector.load %arg4[%c1, %c0_20, %c0_21] : memref<5x32x32xf32, #tpu.memory_space<vmem>>, vector<1x32x32xf32>
    %55 = vector.shape_cast %54 : vector<1x32x32xf32> to vector<32x32xf32>
    %cst_22 = arith.constant dense<0.000000e+00> : vector<8x32xf32>
    %56 = tpu.matmul %47, %55, %cst_22 {dimension_numbers = #tpu.dot_dimension_numbers<[1], [0], [0], [1], [0, 0, 1, 1], [], []>} : vector<8x32xf32>, vector<32x32xf32>, vector<8x32xf32> -> vector<8x32xf32>
    %c1_23 = arith.constant 1 : index
    %c0_24 = arith.constant 0 : index
    %57 = vector.load %arg5[%c1_23, %c0_24] : memref<16x32xf32, #tpu.memory_space<vmem>>, vector<1x32xf32>
    %58 = vector.broadcast %57 : vector<1x32xf32> to vector<8x32xf32>
    %59 = arith.addf %56, %58 : vector<8x32xf32>
    %c2 = arith.constant 2 : index
    %c0_25 = arith.constant 0 : index
    %c0_26 = arith.constant 0 : index
    %60 = vector.load %arg4[%c2, %c0_25, %c0_26] : memref<5x32x32xf32, #tpu.memory_space<vmem>>, vector<1x32x32xf32>
    %61 = vector.shape_cast %60 : vector<1x32x32xf32> to vector<32x32xf32>
    %cst_27 = arith.constant dense<0.000000e+00> : vector<8x32xf32>
    %62 = tpu.matmul %47, %61, %cst_27 {dimension_numbers = #tpu.dot_dimension_numbers<[1], [0], [0], [1], [0, 0, 1, 1], [], []>} : vector<8x32xf32>, vector<32x32xf32>, vector<8x32xf32> -> vector<8x32xf32>
    %c2_28 = arith.constant 2 : index
    %c0_29 = arith.constant 0 : index
    %63 = vector.load %arg5[%c2_28, %c0_29] : memref<16x32xf32, #tpu.memory_space<vmem>>, vector<1x32xf32>
    %64 = vector.broadcast %63 : vector<1x32xf32> to vector<8x32xf32>
    %65 = arith.addf %62, %64 : vector<8x32xf32>
    %cst_30 = arith.constant dense<0.000000e+00> : vector<8x8xf32>
    %66 = tpu.matmul %59, %53, %cst_30 {dimension_numbers = #tpu.dot_dimension_numbers<[1], [1], [0], [0], [0, 0, 1, 0], [], []>} : vector<8x32xf32>, vector<8x32xf32>, vector<8x8xf32> -> vector<8x8xf32>
    %cst_31 = arith.constant dense<0xFF800000> : vector<8xf32>
    %67 = vector.multi_reduction <maximumf>, %66, %cst_31 [1] : vector<8x8xf32> to vector<8xf32>
    %68 = vector.shape_cast %67 : vector<8xf32> to vector<8x1xf32>
    %69 = vector.broadcast %68 : vector<8x1xf32> to vector<8x8xf32>
    %70 = arith.subf %66, %69 : vector<8x8xf32>
    %71 = math.exp %70 : vector<8x8xf32>
    %cst_32 = arith.constant dense<0.000000e+00> : vector<8xf32>
    %72 = vector.multi_reduction <add>, %71, %cst_32 [1] : vector<8x8xf32> to vector<8xf32>
    %73 = vector.shape_cast %72 : vector<8xf32> to vector<8x1xf32>
    %c0_33 = arith.constant 0 : index
    %c0_34 = arith.constant 0 : index
    %c0_35 = arith.constant 0 : index
    %74 = vector.load %arg3[%c0_33, %c0_34, %c0_35] : memref<1x1x8xf32, #tpu.memory_space<vmem>>, vector<1x1x8xf32>
    %75 = vector.shape_cast %74 : vector<1x1x8xf32> to vector<1x8xf32>
    %76 = vector.broadcast %75 : vector<1x8xf32> to vector<8x8xf32>
    %77 = arith.mulf %71, %76 : vector<8x8xf32>
    %cst_36 = arith.constant dense<0.000000e+00> : vector<8xf32>
    %78 = vector.multi_reduction <add>, %77, %cst_36 [1] : vector<8x8xf32> to vector<8xf32>
    %79 = vector.shape_cast %78 : vector<8xf32> to vector<8x1xf32>
    %80 = tpu.reciprocal %73 {approx = true} : vector<8x1xf32> -> vector<8x1xf32>
    %81 = arith.mulf %79, %80 : vector<8x1xf32>
    %82 = vector.broadcast %81 : vector<8x1xf32> to vector<8x32xf32>
    %83 = arith.mulf %65, %82 : vector<8x32xf32>
    %c3 = arith.constant 3 : index
    %c0_37 = arith.constant 0 : index
    %c0_38 = arith.constant 0 : index
    %84 = vector.load %arg4[%c3, %c0_37, %c0_38] : memref<5x32x32xf32, #tpu.memory_space<vmem>>, vector<1x32x32xf32>
    %85 = vector.shape_cast %84 : vector<1x32x32xf32> to vector<32x32xf32>
    %cst_39 = arith.constant dense<0.000000e+00> : vector<8x32xf32>
    %86 = tpu.matmul %83, %85, %cst_39 {dimension_numbers = #tpu.dot_dimension_numbers<[1], [0], [0], [1], [0, 0, 1, 1], [], []>} : vector<8x32xf32>, vector<32x32xf32>, vector<8x32xf32> -> vector<8x32xf32>
    %c3_40 = arith.constant 3 : index
    %c0_41 = arith.constant 0 : index
    %87 = vector.load %arg5[%c3_40, %c0_41] : memref<16x32xf32, #tpu.memory_space<vmem>>, vector<1x32xf32>
    %88 = vector.broadcast %87 : vector<1x32xf32> to vector<8x32xf32>
    %89 = arith.addf %86, %88 : vector<8x32xf32>
    %c7 = arith.constant 7 : index
    %c0_42 = arith.constant 0 : index
    %90 = vector.load %arg5[%c7, %c0_42] : memref<16x32xf32, #tpu.memory_space<vmem>>, vector<1x32xf32>
    %c8 = arith.constant 8 : index
    %c0_43 = arith.constant 0 : index
    %91 = vector.load %arg5[%c8, %c0_43] : memref<16x32xf32, #tpu.memory_space<vmem>>, vector<1x32xf32>
    %cst_44 = arith.constant dense<0.000000e+00> : vector<8xf32>
    %92 = vector.multi_reduction <add>, %89, %cst_44 [1] : vector<8x32xf32> to vector<8xf32>
    %93 = vector.shape_cast %92 : vector<8xf32> to vector<8x1xf32>
    %cst_45 = arith.constant 3.200000e+01 : f32
    %94 = vector.broadcast %cst_45 : f32 to vector<8x1xf32>
    %95 = arith.divf %93, %94 : vector<8x1xf32>
    %96 = vector.broadcast %95 : vector<8x1xf32> to vector<8x32xf32>
    %97 = arith.subf %89, %96 : vector<8x32xf32>
    %98 = arith.mulf %97, %97 : vector<8x32xf32>
    %cst_46 = arith.constant dense<0.000000e+00> : vector<8xf32>
    %99 = vector.multi_reduction <add>, %98, %cst_46 [1] : vector<8x32xf32> to vector<8xf32>
    %100 = vector.shape_cast %99 : vector<8xf32> to vector<8x1xf32>
    %cst_47 = arith.constant 3.200000e+01 : f32
    %101 = vector.broadcast %cst_47 : f32 to vector<8x1xf32>
    %102 = arith.divf %100, %101 : vector<8x1xf32>
    %103 = vector.broadcast %95 : vector<8x1xf32> to vector<8x32xf32>
    %104 = arith.subf %89, %103 : vector<8x32xf32>
    %cst_48 = arith.constant 9.99999974E-6 : f32
    %105 = vector.broadcast %cst_48 : f32 to vector<8x1xf32>
    %106 = arith.addf %102, %105 : vector<8x1xf32>
    %107 = math.rsqrt %106 : vector<8x1xf32>
    %108 = vector.broadcast %107 : vector<8x1xf32> to vector<8x32xf32>
    %109 = arith.mulf %104, %108 : vector<8x32xf32>
    %110 = vector.broadcast %90 : vector<1x32xf32> to vector<8x32xf32>
    %111 = arith.mulf %109, %110 : vector<8x32xf32>
    %112 = vector.broadcast %91 : vector<1x32xf32> to vector<8x32xf32>
    %113 = arith.addf %111, %112 : vector<8x32xf32>
    %c4 = arith.constant 4 : index
    %c0_49 = arith.constant 0 : index
    %c0_50 = arith.constant 0 : index
    %114 = vector.load %arg4[%c4, %c0_49, %c0_50] : memref<5x32x32xf32, #tpu.memory_space<vmem>>, vector<1x32x32xf32>
    %115 = vector.shape_cast %114 : vector<1x32x32xf32> to vector<32x32xf32>
    %cst_51 = arith.constant dense<0.000000e+00> : vector<8x32xf32>
    %116 = tpu.matmul %113, %115, %cst_51 {dimension_numbers = #tpu.dot_dimension_numbers<[1], [0], [0], [1], [0, 0, 1, 1], [], []>} : vector<8x32xf32>, vector<32x32xf32>, vector<8x32xf32> -> vector<8x32xf32>
    %c4_52 = arith.constant 4 : index
    %c0_53 = arith.constant 0 : index
    %117 = vector.load %arg5[%c4_52, %c0_53] : memref<16x32xf32, #tpu.memory_space<vmem>>, vector<1x32xf32>
    %118 = vector.broadcast %117 : vector<1x32xf32> to vector<8x32xf32>
    %119 = arith.addf %116, %118 : vector<8x32xf32>
    %120 = arith.addf %113, %119 : vector<8x32xf32>
    %c9 = arith.constant 9 : index
    %c0_54 = arith.constant 0 : index
    %121 = vector.load %arg5[%c9, %c0_54] : memref<16x32xf32, #tpu.memory_space<vmem>>, vector<1x32xf32>
    %c10 = arith.constant 10 : index
    %c0_55 = arith.constant 0 : index
    %122 = vector.load %arg5[%c10, %c0_55] : memref<16x32xf32, #tpu.memory_space<vmem>>, vector<1x32xf32>
    %cst_56 = arith.constant dense<0.000000e+00> : vector<8xf32>
    %123 = vector.multi_reduction <add>, %120, %cst_56 [1] : vector<8x32xf32> to vector<8xf32>
    %124 = vector.shape_cast %123 : vector<8xf32> to vector<8x1xf32>
    %cst_57 = arith.constant 3.200000e+01 : f32
    %125 = vector.broadcast %cst_57 : f32 to vector<8x1xf32>
    %126 = arith.divf %124, %125 : vector<8x1xf32>
    %127 = vector.broadcast %126 : vector<8x1xf32> to vector<8x32xf32>
    %128 = arith.subf %120, %127 : vector<8x32xf32>
    %129 = arith.mulf %128, %128 : vector<8x32xf32>
    %cst_58 = arith.constant dense<0.000000e+00> : vector<8xf32>
    %130 = vector.multi_reduction <add>, %129, %cst_58 [1] : vector<8x32xf32> to vector<8xf32>
    %131 = vector.shape_cast %130 : vector<8xf32> to vector<8x1xf32>
    %cst_59 = arith.constant 3.200000e+01 : f32
    %132 = vector.broadcast %cst_59 : f32 to vector<8x1xf32>
    %133 = arith.divf %131, %132 : vector<8x1xf32>
    %134 = vector.broadcast %126 : vector<8x1xf32> to vector<8x32xf32>
    %135 = arith.subf %120, %134 : vector<8x32xf32>
    %cst_60 = arith.constant 9.99999974E-6 : f32
    %136 = vector.broadcast %cst_60 : f32 to vector<8x1xf32>
    %137 = arith.addf %133, %136 : vector<8x1xf32>
    %138 = math.rsqrt %137 : vector<8x1xf32>
    %139 = vector.broadcast %138 : vector<8x1xf32> to vector<8x32xf32>
    %140 = arith.mulf %135, %139 : vector<8x32xf32>
    %141 = vector.broadcast %121 : vector<1x32xf32> to vector<8x32xf32>
    %142 = arith.mulf %140, %141 : vector<8x32xf32>
    %143 = vector.broadcast %122 : vector<1x32xf32> to vector<8x32xf32>
    %144 = arith.addf %142, %143 : vector<8x32xf32>
    %c0_61 = arith.constant 0 : index
    %c0_62 = arith.constant 0 : index
    %145 = vector.load %arg6[%c0_61, %c0_62] : memref<8x32xf32, #tpu.memory_space<vmem>>, vector<8x32xf32>
    tpu.vector_store %arg6[%c0_61, %c0_62], %144 {strides = array<i32>} : memref<8x32xf32, #tpu.memory_space<vmem>>, vector<8x32xf32>,
    return
  }
  func.func @transform_0(%arg0: i32) -> (i32, i32) {
    %c0_i32 = arith.constant 0 : i32
    %c0_i32_0 = arith.constant 0 : i32
    return %arg0, %c0_i32 : i32, i32
  }
  func.func @transform_1(%arg0: i32) -> (i32, i32) {
    %c0_i32 = arith.constant 0 : i32
    %c0_i32_0 = arith.constant 0 : i32
    return %arg0, %c0_i32 : i32, i32
  }
  func.func @transform_2(%arg0: i32) -> (i32, i32, i32) {
    %c0_i32 = arith.constant 0 : i32
    %c0_i32_0 = arith.constant 0 : i32
    %c0_i32_1 = arith.constant 0 : i32
    return %arg0, %c0_i32, %c0_i32_0 : i32, i32, i32
  }
  func.func @transform_3(%arg0: i32) -> (i32, i32, i32) {
    %c0_i32 = arith.constant 0 : i32
    %c0_i32_0 = arith.constant 0 : i32
    %c0_i32_1 = arith.constant 0 : i32
    %c0_i32_2 = arith.constant 0 : i32
    return %c0_i32, %c0_i32_0, %c0_i32_1 : i32, i32, i32
  }
  func.func @transform_4(%arg0: i32) -> (i32, i32) {
    %c0_i32 = arith.constant 0 : i32
    %c0_i32_0 = arith.constant 0 : i32
    %c0_i32_1 = arith.constant 0 : i32
    return %c0_i32, %c0_i32_0 : i32, i32
  }
  func.func @transform_5(%arg0: i32) -> (i32, i32) {
    %c0_i32 = arith.constant 0 : i32
    %c0_i32_0 = arith.constant 0 : i32
    return %arg0, %c0_i32 : i32, i32
  }
}

module attributes {stable_mosaic.version = 11 : i64} {
  func.func @kernel(%arg0: i32, %arg1: memref<8x32xf32, #tpu.memory_space<vmem>>, %arg2: memref<8x32xf32, #tpu.memory_space<vmem>>, %arg3: memref<1x1x8xf32, #tpu.memory_space<vmem>>, %arg4: memref<5x32x32xf32, #tpu.memory_space<vmem>>, %arg5: memref<16x32xf32, #tpu.memory_space<vmem>>, %arg6: memref<8x32xf32, #tpu.memory_space<vmem>>) attributes {dimension_semantics = [#tpu.dimension_semantics<parallel>], iteration_bounds = array<i64: 2>, scalar_prefetch = 0 : i64, scratch_operands = 0 : i64, tpu.core_type = #tpu.core_type<tc>, window_params = [{transform_indices = @transform_0, window_bounds = array<i64: 8, 32>}, {transform_indices = @transform_1, window_bounds = array<i64: 8, 32>}, {transform_indices = @transform_2, window_bounds = array<i64: 1, 1, 8>}, {pipeline_mode = #tpu.pipeline_mode<synchronous>, transform_indices = @transform_3, window_bounds = array<i64: 5, 32, 32>}, {pipeline_mode = #tpu.pipeline_mode<synchronous>, transform_indices = @transform_4, window_bounds = array<i64: 16, 32>}, {transform_indices = @transform_5, window_bounds = array<i64: 8, 32>}]} {
    %c5 = arith.constant 5 : index
    %c0 = arith.constant 0 : index
    %0 = vector.load %arg5[%c5, %c0] : memref<16x32xf32, #tpu.memory_space<vmem>>, vector<1x32xf32>
    %c6 = arith.constant 6 : index
    %c0_0 = arith.constant 0 : index
    %1 = vector.load %arg5[%c6, %c0_0] : memref<16x32xf32, #tpu.memory_space<vmem>>, vector<1x32xf32>
    %c0_1 = arith.constant 0 : index
    %c0_2 = arith.constant 0 : index
    %2 = vector.load %arg1[%c0_1, %c0_2] : memref<8x32xf32, #tpu.memory_space<vmem>>, vector<8x32xf32>
    %cst = arith.constant dense<0.000000e+00> : vector<8xf32>
    %3 = vector.multi_reduction <add>, %2, %cst [1] : vector<8x32xf32> to vector<8xf32>
    %4 = vector.shape_cast %3 : vector<8xf32> to vector<8x1xf32>
    %cst_3 = arith.constant 3.200000e+01 : f32
    %5 = vector.broadcast %cst_3 : f32 to vector<8x1xf32>
    %6 = arith.divf %4, %5 : vector<8x1xf32>
    %7 = vector.broadcast %6 : vector<8x1xf32> to vector<8x32xf32>
    %8 = arith.subf %2, %7 : vector<8x32xf32>
    %9 = arith.mulf %8, %8 : vector<8x32xf32>
    %cst_4 = arith.constant dense<0.000000e+00> : vector<8xf32>
    %10 = vector.multi_reduction <add>, %9, %cst_4 [1] : vector<8x32xf32> to vector<8xf32>
    %11 = vector.shape_cast %10 : vector<8xf32> to vector<8x1xf32>
    %cst_5 = arith.constant 3.200000e+01 : f32
    %12 = vector.broadcast %cst_5 : f32 to vector<8x1xf32>
    %13 = arith.divf %11, %12 : vector<8x1xf32>
    %14 = vector.broadcast %6 : vector<8x1xf32> to vector<8x32xf32>
    %15 = arith.subf %2, %14 : vector<8x32xf32>
    %cst_6 = arith.constant 9.99999974E-6 : f32
    %16 = vector.broadcast %cst_6 : f32 to vector<8x1xf32>
    %17 = arith.addf %13, %16 : vector<8x1xf32>
    %18 = math.rsqrt %17 : vector<8x1xf32>
    %19 = vector.broadcast %18 : vector<8x1xf32> to vector<8x32xf32>
    %20 = arith.mulf %15, %19 : vector<8x32xf32>
    %21 = vector.broadcast %0 : vector<1x32xf32> to vector<8x32xf32>
    %22 = arith.mulf %20, %21 : vector<8x32xf32>
    %23 = vector.broadcast %1 : vector<1x32xf32> to vector<8x32xf32>
    %24 = arith.addf %22, %23 : vector<8x32xf32>
    %c0_7 = arith.constant 0 : index
    %c0_8 = arith.constant 0 : index
    %25 = vector.load %arg2[%c0_7, %c0_8] : memref<8x32xf32, #tpu.memory_space<vmem>>, vector<8x32xf32>
    %cst_9 = arith.constant dense<0.000000e+00> : vector<8xf32>
    %26 = vector.multi_reduction <add>, %25, %cst_9 [1] : vector<8x32xf32> to vector<8xf32>
    %27 = vector.shape_cast %26 : vector<8xf32> to vector<8x1xf32>
    %cst_10 = arith.constant 3.200000e+01 : f32
    %28 = vector.broadcast %cst_10 : f32 to vector<8x1xf32>
    %29 = arith.divf %27, %28 : vector<8x1xf32>
    %30 = vector.broadcast %29 : vector<8x1xf32> to vector<8x32xf32>
    %31 = arith.subf %25, %30 : vector<8x32xf32>
    %32 = arith.mulf %31, %31 : vector<8x32xf32>
    %cst_11 = arith.constant dense<0.000000e+00> : vector<8xf32>
    %33 = vector.multi_reduction <add>, %32, %cst_11 [1] : vector<8x32xf32> to vector<8xf32>
    %34 = vector.shape_cast %33 : vector<8xf32> to vector<8x1xf32>
    %cst_12 = arith.constant 3.200000e+01 : f32
    %35 = vector.broadcast %cst_12 : f32 to vector<8x1xf32>
    %36 = arith.divf %34, %35 : vector<8x1xf32>
    %37 = vector.broadcast %29 : vector<8x1xf32> to vector<8x32xf32>
    %38 = arith.subf %25, %37 : vector<8x32xf32>
    %cst_13 = arith.constant 9.99999974E-6 : f32
    %39 = vector.broadcast %cst_13 : f32 to vector<8x1xf32>
    %40 = arith.addf %36, %39 : vector<8x1xf32>
    %41 = math.rsqrt %40 : vector<8x1xf32>
    %42 = vector.broadcast %41 : vector<8x1xf32> to vector<8x32xf32>
    %43 = arith.mulf %38, %42 : vector<8x32xf32>
    %44 = vector.broadcast %0 : vector<1x32xf32> to vector<8x32xf32>
    %45 = arith.mulf %43, %44 : vector<8x32xf32>
    %46 = vector.broadcast %1 : vector<1x32xf32> to vector<8x32xf32>
    %47 = arith.addf %45, %46 : vector<8x32xf32>
    %c0_14 = arith.constant 0 : index
    %c0_15 = arith.constant 0 : index
    %c0_16 = arith.constant 0 : index
    %48 = vector.load %arg4[%c0_14, %c0_15, %c0_16] : memref<5x32x32xf32, #tpu.memory_space<vmem>>, vector<1x32x32xf32>
    %49 = vector.shape_cast %48 : vector<1x32x32xf32> to vector<32x32xf32>
    %cst_17 = arith.constant dense<0.000000e+00> : vector<8x32xf32>
    %50 = tpu.matmul %24, %49, %cst_17 {dimension_numbers = #tpu.dot_dimension_numbers<[1], [0], [0], [1], [0, 0, 1, 1], [], []>} : vector<8x32xf32>, vector<32x32xf32>, vector<8x32xf32> -> vector<8x32xf32>
    %c0_18 = arith.constant 0 : index
    %c0_19 = arith.constant 0 : index
    %51 = vector.load %arg5[%c0_18, %c0_19] : memref<16x32xf32, #tpu.memory_space<vmem>>, vector<1x32xf32>
    %52 = vector.broadcast %51 : vector<1x32xf32> to vector<8x32xf32>
    %53 = arith.addf %50, %52 : vector<8x32xf32>
    %c1 = arith.constant 1 : index
    %c0_20 = arith.constant 0 : index
    %c0_21 = arith.constant 0 : index
    %54 = vector.load %arg4[%c1, %c0_20, %c0_21] : memref<5x32x32xf32, #tpu.memory_space<vmem>>, vector<1x32x32xf32>
    %55 = vector.shape_cast %54 : vector<1x32x32xf32> to vector<32x32xf32>
    %cst_22 = arith.constant dense<0.000000e+00> : vector<8x32xf32>
    %56 = tpu.matmul %47, %55, %cst_22 {dimension_numbers = #tpu.dot_dimension_numbers<[1], [0], [0], [1], [0, 0, 1, 1], [], []>} : vector<8x32xf32>, vector<32x32xf32>, vector<8x32xf32> -> vector<8x32xf32>
    %c1_23 = arith.constant 1 : index
    %c0_24 = arith.constant 0 : index
    %57 = vector.load %arg5[%c1_23, %c0_24] : memref<16x32xf32, #tpu.memory_space<vmem>>, vector<1x32xf32>
    %58 = vector.broadcast %57 : vector<1x32xf32> to vector<8x32xf32>
    %59 = arith.addf %56, %58 : vector<8x32xf32>
    %c2 = arith.constant 2 : index
    %c0_25 = arith.constant 0 : index
    %c0_26 = arith.constant 0 : index
    %60 = vector.load %arg4[%c2, %c0_25, %c0_26] : memref<5x32x32xf32, #tpu.memory_space<vmem>>, vector<1x32x32xf32>
    %61 = vector.shape_cast %60 : vector<1x32x32xf32> to vector<32x32xf32>
    %cst_27 = arith.constant dense<0.000000e+00> : vector<8x32xf32>
    %62 = tpu.matmul %47, %61, %cst_27 {dimension_numbers = #tpu.dot_dimension_numbers<[1], [0], [0], [1], [0, 0, 1, 1], [], []>} : vector<8x32xf32>, vector<32x32xf32>, vector<8x32xf32> -> vector<8x32xf32>
    %c2_28 = arith.constant 2 : index
    %c0_29 = arith.constant 0 : index
    %63 = vector.load %arg5[%c2_28, %c0_29] : memref<16x32xf32, #tpu.memory_space<vmem>>, vector<1x32xf32>
    %64 = vector.broadcast %63 : vector<1x32xf32> to vector<8x32xf32>
    %65 = arith.addf %62, %64 : vector<8x32xf32>
    %cst_30 = arith.constant dense<0.000000e+00> : vector<8x8xf32>
    %66 = tpu.matmul %59, %53, %cst_30 {dimension_numbers = #tpu.dot_dimension_numbers<[1], [1], [0], [0], [0, 0, 1, 0], [], []>} : vector<8x32xf32>, vector<8x32xf32>, vector<8x8xf32> -> vector<8x8xf32>
    %cst_31 = arith.constant dense<0xFF800000> : vector<8xf32>
    %67 = vector.multi_reduction <maximumf>, %66, %cst_31 [1] : vector<8x8xf32> to vector<8xf32>
    %68 = vector.shape_cast %67 : vector<8xf32> to vector<8x1xf32>
    %69 = vector.broadcast %68 : vector<8x1xf32> to vector<8x8xf32>
    %70 = arith.subf %66, %69 : vector<8x8xf32>
    %71 = math.exp %70 : vector<8x8xf32>
    %cst_32 = arith.constant dense<0.000000e+00> : vector<8xf32>
    %72 = vector.multi_reduction <add>, %71, %cst_32 [1] : vector<8x8xf32> to vector<8xf32>
    %73 = vector.shape_cast %72 : vector<8xf32> to vector<8x1xf32>
    %c0_33 = arith.constant 0 : index
    %c0_34 = arith.constant 0 : index
    %c0_35 = arith.constant 0 : index
    %74 = vector.load %arg3[%c0_33, %c0_34, %c0_35] : memref<1x1x8xf32, #tpu.memory_space<vmem>>, vector<1x1x8xf32>
    %75 = vector.shape_cast %74 : vector<1x1x8xf32> to vector<1x8xf32>
    %76 = vector.broadcast %75 : vector<1x8xf32> to vector<8x8xf32>
    %77 = arith.mulf %71, %76 : vector<8x8xf32>
    %cst_36 = arith.constant dense<0.000000e+00> : vector<8xf32>
    %78 = vector.multi_reduction <add>, %77, %cst_36 [1] : vector<8x8xf32> to vector<8xf32>
    %79 = vector.shape_cast %78 : vector<8xf32> to vector<8x1xf32>
    %80 = tpu.reciprocal %73 {approx = true} : vector<8x1xf32> -> vector<8x1xf32>
    %81 = arith.mulf %79, %80 : vector<8x1xf32>
    %82 = vector.broadcast %81 : vector<8x1xf32> to vector<8x32xf32>
    %83 = arith.mulf %65, %82 : vector<8x32xf32>
    %c3 = arith.constant 3 : index
    %c0_37 = arith.constant 0 : index
    %c0_38 = arith.constant 0 : index
    %84 = vector.load %arg4[%c3, %c0_37, %c0_38] : memref<5x32x32xf32, #tpu.memory_space<vmem>>, vector<1x32x32xf32>
    %85 = vector.shape_cast %84 : vector<1x32x32xf32> to vector<32x32xf32>
    %cst_39 = arith.constant dense<0.000000e+00> : vector<8x32xf32>
    %86 = tpu.matmul %83, %85, %cst_39 {dimension_numbers = #tpu.dot_dimension_numbers<[1], [0], [0], [1], [0, 0, 1, 1], [], []>} : vector<8x32xf32>, vector<32x32xf32>, vector<8x32xf32> -> vector<8x32xf32>
    %c3_40 = arith.constant 3 : index
    %c0_41 = arith.constant 0 : index
    %87 = vector.load %arg5[%c3_40, %c0_41] : memref<16x32xf32, #tpu.memory_space<vmem>>, vector<1x32xf32>
    %88 = vector.broadcast %87 : vector<1x32xf32> to vector<8x32xf32>
    %89 = arith.addf %86, %88 : vector<8x32xf32>
    %c7 = arith.constant 7 : index
    %c0_42 = arith.constant 0 : index
    %90 = vector.load %arg5[%c7, %c0_42] : memref<16x32xf32, #tpu.memory_space<vmem>>, vector<1x32xf32>
    %c8 = arith.constant 8 : index
    %c0_43 = arith.constant 0 : index
    %91 = vector.load %arg5[%c8, %c0_43] : memref<16x32xf32, #tpu.memory_space<vmem>>, vector<1x32xf32>
    %cst_44 = arith.constant dense<0.000000e+00> : vector<8xf32>
    %92 = vector.multi_reduction <add>, %89, %cst_44 [1] : vector<8x32xf32> to vector<8xf32>
    %93 = vector.shape_cast %92 : vector<8xf32> to vector<8x1xf32>
    %cst_45 = arith.constant 3.200000e+01 : f32
    %94 = vector.broadcast %cst_45 : f32 to vector<8x1xf32>
    %95 = arith.divf %93, %94 : vector<8x1xf32>
    %96 = vector.broadcast %95 : vector<8x1xf32> to vector<8x32xf32>
    %97 = arith.subf %89, %96 : vector<8x32xf32>
    %98 = arith.mulf %97, %97 : vector<8x32xf32>
    %cst_46 = arith.constant dense<0.000000e+00> : vector<8xf32>
    %99 = vector.multi_reduction <add>, %98, %cst_46 [1] : vector<8x32xf32> to vector<8xf32>
    %100 = vector.shape_cast %99 : vector<8xf32> to vector<8x1xf32>
    %cst_47 = arith.constant 3.200000e+01 : f32
    %101 = vector.broadcast %cst_47 : f32 to vector<8x1xf32>
    %102 = arith.divf %100, %101 : vector<8x1xf32>
    %103 = vector.broadcast %95 : vector<8x1xf32> to vector<8x32xf32>
    %104 = arith.subf %89, %103 : vector<8x32xf32>
    %cst_48 = arith.constant 9.99999974E-6 : f32
    %105 = vector.broadcast %cst_48 : f32 to vector<8x1xf32>
    %106 = arith.addf %102, %105 : vector<8x1xf32>
    %107 = math.rsqrt %106 : vector<8x1xf32>
    %108 = vector.broadcast %107 : vector<8x1xf32> to vector<8x32xf32>
    %109 = arith.mulf %104, %108 : vector<8x32xf32>
    %110 = vector.broadcast %90 : vector<1x32xf32> to vector<8x32xf32>
    %111 = arith.mulf %109, %110 : vector<8x32xf32>
    %112 = vector.broadcast %91 : vector<1x32xf32> to vector<8x32xf32>
    %113 = arith.addf %111, %112 : vector<8x32xf32>
    %c4 = arith.constant 4 : index
    %c0_49 = arith.constant 0 : index
    %c0_50 = arith.constant 0 : index
    %114 = vector.load %arg4[%c4, %c0_49, %c0_50] : memref<5x32x32xf32, #tpu.memory_space<vmem>>, vector<1x32x32xf32>
    %115 = vector.shape_cast %114 : vector<1x32x32xf32> to vector<32x32xf32>
    %cst_51 = arith.constant dense<0.000000e+00> : vector<8x32xf32>
    %116 = tpu.matmul %113, %115, %cst_51 {dimension_numbers = #tpu.dot_dimension_numbers<[1], [0], [0], [1], [0, 0, 1, 1], [], []>} : vector<8x32xf32>, vector<32x32xf32>, vector<8x32xf32> -> vector<8x32xf32>
    %c4_52 = arith.constant 4 : index
    %c0_53 = arith.constant 0 : index
    %117 = vector.load %arg5[%c4_52, %c0_53] : memref<16x32xf32, #tpu.memory_space<vmem>>, vector<1x32xf32>
    %118 = vector.broadcast %117 : vector<1x32xf32> to vector<8x32xf32>
    %119 = arith.addf %116, %118 : vector<8x32xf32>
    %120 = arith.addf %113, %119 : vector<8x32xf32>
    %c9 = arith.constant 9 : index
    %c0_54 = arith.constant 0 : index
    %121 = vector.load %arg5[%c9, %c0_54] : memref<16x32xf32, #tpu.memory_space<vmem>>, vector<1x32xf32>
    %c10 = arith.constant 10 : index
    %c0_55 = arith.constant 0 : index
    %122 = vector.load %arg5[%c10, %c0_55] : memref<16x32xf32, #tpu.memory_space<vmem>>, vector<1x32xf32>
    %cst_56 = arith.constant dense<0.000000e+00> : vector<8xf32>
    %123 = vector.multi_reduction <add>, %120, %cst_56 [1] : vector<8x32xf32> to vector<8xf32>
    %124 = vector.shape_cast %123 : vector<8xf32> to vector<8x1xf32>
    %cst_57 = arith.constant 3.200000e+01 : f32
    %125 = vector.broadcast %cst_57 : f32 to vector<8x1xf32>
    %126 = arith.divf %124, %125 : vector<8x1xf32>
    %127 = vector.broadcast %126 : vector<8x1xf32> to vector<8x32xf32>
    %128 = arith.subf %120, %127 : vector<8x32xf32>
    %129 = arith.mulf %128, %128 : vector<8x32xf32>
    %cst_58 = arith.constant dense<0.000000e+00> : vector<8xf32>
    %130 = vector.multi_reduction <add>, %129, %cst_58 [1] : vector<8x32xf32> to vector<8xf32>
    %131 = vector.shape_cast %130 : vector<8xf32> to vector<8x1xf32>
    %cst_59 = arith.constant 3.200000e+01 : f32
    %132 = vector.broadcast %cst_59 : f32 to vector<8x1xf32>
    %133 = arith.divf %131, %132 : vector<8x1xf32>
    %134 = vector.broadcast %126 : vector<8x1xf32> to vector<8x32xf32>
    %135 = arith.subf %120, %134 : vector<8x32xf32>
    %cst_60 = arith.constant 9.99999974E-6 : f32
    %136 = vector.broadcast %cst_60 : f32 to vector<8x1xf32>
    %137 = arith.addf %133, %136 : vector<8x1xf32>
    %138 = math.rsqrt %137 : vector<8x1xf32>
    %139 = vector.broadcast %138 : vector<8x1xf32> to vector<8x32xf32>
    %140 = arith.mulf %135, %139 : vector<8x32xf32>
    %141 = vector.broadcast %121 : vector<1x32xf32> to vector<8x32xf32>
    %142 = arith.mulf %140, %141 : vector<8x32xf32>
    %143 = vector.broadcast %122 : vector<1x32xf32> to vector<8x32xf32>
    %144 = arith.addf %142, %143 : vector<8x32xf32>
    %c0_61 = arith.constant 0 : index
    %c0_62 = arith.constant 0 : index
    %145 = vector.load %arg6[%c0_61, %c0_62] : memref<8x32xf32, #tpu.memory_space<vmem>>, vector<8x32xf32>
    tpu.vector_store %arg6[%c0_61, %c0_62], %144 {strides = array<i32>} : memref<8x32xf32, #tpu.memory_space<vmem>>, vector<8x32xf32>,
    return
  }
  func.func @transform_0(%arg0: i32) -> (i32, i32) {
    %c0_i32 = arith.constant 0 : i32
    %c0_i32_0 = arith.constant 0 : i32
    return %arg0, %c0_i32 : i32, i32
  }
  func.func @transform_1(%arg0: i32) -> (i32, i32) {
    %c0_i32 = arith.constant 0 : i32
    %c0_i32_0 = arith.constant 0 : i32
    return %arg0, %c0_i32 : i32, i32
  }
  func.func @transform_2(%arg0: i32) -> (i32, i32, i32) {
    %c0_i32 = arith.constant 0 : i32
    %c0_i32_0 = arith.constant 0 : i32
    %c0_i32_1 = arith.constant 0 : i32
    return %arg0, %c0_i32, %c0_i32_0 : i32, i32, i32
  }
  func.func @transform_3(%arg0: i32) -> (i32, i32, i32) {
    %c0_i32 = arith.constant 0 : i32
    %c0_i32_0 = arith.constant 0 : i32
    %c0_i32_1 = arith.constant 0 : i32
    %c0_i32_2 = arith.constant 0 : i32
    return %c0_i32, %c0_i32_0, %c0_i32_1 : i32, i32, i32
  }
  func.func @transform_4(%arg0: i32) -> (i32, i32) {
    %c0_i32 = arith.constant 0 : i32
    %c0_i32_0 = arith.constant 0 : i32
    %c0_i32_1 = arith.constant 0 : i32
    return %c0_i32, %c0_i32_0 : i32, i32
  }
  func.func @transform_5(%arg0: i32) -> (i32, i32) {
    %c0_i32 = arith.constant 0 : i32
    %c0_i32_0 = arith.constant 0 : i32
    return %arg0, %c0_i32 : i32, i32
  }
}

</mosaic_0001>

<llo_original>
// kernel: tpu_custom_call.1
$region0: #{tpu_custom_call.1}
  #allocation0 [shape = 'u32[]', space=smem, size = 0x4, offset = 0x4, fixed_abs, tag = 'smem constant byte address 0x4 - core index']
  #allocation1 [shape = 'u32[144,128]{1,0:T(1,128)}', space=vmem, size = 0x12000, scoped, tag = 'internal scratch']
  %s0 = inlined_call_operand.hbm [shape: f32[16,32], index: 0, kind: input, shape index: {}]
  %s1 = inlined_call_operand.hbm [shape: f32[16,32], index: 1, kind: input, shape index: {}]
  %s2 = inlined_call_operand.vmem [shape: f32[2,1,8], index: 2, kind: input, shape index: {}]
  %s3 = inlined_call_operand.hbm [shape: f32[5,32,32], index: 3, kind: input, shape index: {}]
  %s4 = inlined_call_operand.hbm [shape: f32[16,32], index: 4, kind: input, shape index: {}]
  %s5 = inlined_call_operand.hbm [shape: f32[16,32], index: 5, kind: output, shape index: {}]
  %s6 = sld [smem:[#allocation0]]
  $region69: #{tpu_custom_call.1} parent=0
    _
  %s8 = ssub.s32 1, %s6
  %s9 = scalar_select 0, %s8, %s6
  $region1: #{tpu_custom_call.1} parent=0
    #allocation2 [shape = 'u8[8192]{0}', space=vmem, size = 0x2000, scoped, tag = 'input window, operand 0']
    #allocation3 [shape = 's32[2]{0}', space=sflag, size = 0x8, scoped, tag = 'scoped memory for tpu_custom_call.1']
    #allocation4 [shape = 's32[2]{0}', space=sflag, size = 0x8, scoped, tag = 'scoped memory for tpu_custom_call.1']
    #allocation5 [shape = 'u8[8192]{0}', space=vmem, size = 0x2000, scoped, tag = 'input window, operand 1']
    #allocation6 [shape = 's32[2]{0}', space=sflag, size = 0x8, scoped, tag = 'scoped memory for tpu_custom_call.1']
    #allocation7 [shape = 'u8[81920]{0}', space=vmem, size = 0x14000, scoped, tag = 'input window, operand 3, single buffered']
    #allocation8 [shape = 'u8[8192]{0}', space=vmem, size = 0x2000, scoped, tag = 'input window, operand 4, single buffered']
    #allocation9 [shape = 's32[1]{0}', space=sflag, size = 0x4, scoped, tag = 'scoped memory for tpu_custom_call.1']
    #allocation10 [shape = 'u8[8192]{0}', space=vmem, size = 0x2000, scoped, tag = 'output window, operand 0']
    %10 = vsyncpa [#allocation3], 0
    %s11 = scalar_lea.sflag [#allocation3], 1
    %12 = vsyncpa %s11, 0
    %13 = vsyncpa [#allocation6], 0
    %s14 = scalar_lea.sflag [#allocation6], 1
    %15 = vsyncpa %s14, 0
    %16 = vsyncpa [#allocation9], 0
    %17 = vsyncpa [#allocation4], 0
    %s18 = scalar_lea.sflag [#allocation4], 1
    %19 = vsyncpa %s18, 0
    loop: start=0, step=1, limit=4
    $region2: #{tpu_custom_call.1} parent=1 // loop_pre_header
      _
    $region3: #{tpu_custom_call.1} parent=1 // loop_header
      %s21 = sphi 0, %s25
      %p22 = scmp.ge.s32.totalorder %s21, 4
      %s31 = sphi 0, %s33
      %s34 = sphi 0, %s31
      %s35 = sphi 0, %s34
      %s51 = sphi 0, %s35
      %s57 = sphi 0, %s59
      %s60 = sphi 0, %s57
      %s61 = sphi 0, %s60
      %s77 = sphi 0, %s61
      %s83 = sphi 0, %s85
      %s86 = sphi 0, %s83
      %s87 = sphi 0, %s86
      %s103 = sphi 0, %s87
      %s107 = sphi 0, %s107
      %s109 = sphi 0, %s107
      %s110 = sphi 0, %s109
      %s124 = sphi 0, %s110
      %s128 = sphi 0, %s128
      %s130 = sphi 0, %s128
      %s131 = sphi 0, %s130
      %s145 = sphi 0, %s131
      %s151 = sphi 0, %s153
      %s154 = sphi 0, %s151
      %s155 = sphi 0, %s154
      %s171 = sphi 0, %s155
    $region4: #{tpu_custom_call.1} parent=1 // loop_header_branch
      %24 = sbr.rel (%p22) target = $region8
    $region5: #{tpu_custom_call.1} parent=1 // loop_body
      %s26 = ssub.s32 %s21, 1
      %s27 = ssub.s32 %s21, 2
      %s28 = sadd.s32 %s21, 1
      %s29 = ssub.s32 %s21, %s28
      %p30 = scmp.eq.s32.totalorder %s29, 0
      %s32 = sadd.s32 %s31, 1
      %s33 = scalar_select %p30, %s31, %s32
      %p36 = pneg %p30
      %p37 = scmp.eq.s32.totalorder %s21, 1
      %p38 = por %p36, %p37
      %p39 = scmp.ne.s32.totalorder %s31, %s34
      %p40 = scmp.eq.s32.totalorder %s21, 0
      %p41 = por %p39, %p40
      %p42 = scmp.ne.s32.totalorder %s31, %s34
      %p43 = scmp.eq.s32.totalorder %s26, 1
      %p44 = por %p42, %p43
      %p45 = scmp.ne.s32.totalorder %s34, %s35
      %p46 = scmp.eq.s32.totalorder %s26, 0
      %p47 = por %p45, %p46
      %p48 = scmp.ne.s32.totalorder %s34, %s35
      %p49 = scmp.eq.s32.totalorder %s27, 1
      %p50 = por %p48, %p49
      %p52 = scmp.ne.s32.totalorder %s35, %s51
      %p53 = scmp.eq.s32.totalorder %s27, 0
      %p54 = por %p52, %p53
      %s55 = ssub.s32 %s21, %s28
      %p56 = scmp.eq.s32.totalorder %s55, 0
      %s58 = sadd.s32 %s57, 1
      %s59 = scalar_select %p56, %s57, %s58
      %p62 = pneg %p56
      %p63 = scmp.eq.s32.totalorder %s21, 1
      %p64 = por %p62, %p63
      %p65 = scmp.ne.s32.totalorder %s57, %s60
      %p66 = scmp.eq.s32.totalorder %s21, 0
      %p67 = por %p65, %p66
      %p68 = scmp.ne.s32.totalorder %s57, %s60
      %p69 = scmp.eq.s32.totalorder %s26, 1
      %p70 = por %p68, %p69
      %p71 = scmp.ne.s32.totalorder %s60, %s61
      %p72 = scmp.eq.s32.totalorder %s26, 0
      %p73 = por %p71, %p72
      %p74 = scmp.ne.s32.totalorder %s60, %s61
      %p75 = scmp.eq.s32.totalorder %s27, 1
      %p76 = por %p74, %p75
      %p78 = scmp.ne.s32.totalorder %s61, %s77
      %p79 = scmp.eq.s32.totalorder %s27, 0
      %p80 = por %p78, %p79
      %s81 = ssub.s32 %s21, %s28
      %p82 = scmp.eq.s32.totalorder %s81, 0
      %s84 = sadd.s32 %s83, 1
      %s85 = scalar_select %p82, %s83, %s84
      %p88 = pneg %p82
      %p89 = scmp.eq.s32.totalorder %s21, 1
      %p90 = por %p88, %p89
      %p91 = scmp.ne.s32.totalorder %s83, %s86
      %p92 = scmp.eq.s32.totalorder %s21, 0
      %p93 = por %p91, %p92
      %p94 = scmp.ne.s32.totalorder %s83, %s86
      %p95 = scmp.eq.s32.totalorder %s26, 1
      %p96 = por %p94, %p95
      %p97 = scmp.ne.s32.totalorder %s86, %s87
      %p98 = scmp.eq.s32.totalorder %s26, 0
      %p99 = por %p97, %p98
      %p100 = scmp.ne.s32.totalorder %s86, %s87
      %p101 = scmp.eq.s32.totalorder %s27, 1
      %p102 = por %p100, %p101
      %p104 = scmp.ne.s32.totalorder %s87, %s103
      %p105 = scmp.eq.s32.totalorder %s27, 0
      %p106 = por %p104, %p105
      %s108 = sadd.s32 %s107, 1
      %p111 = scmp.eq.s32.totalorder %s21, 1
      %p112 = scmp.ne.s32.totalorder %s107, %s109
      %p113 = scmp.eq.s32.totalorder %s21, 0
      %p114 = por %p112, %p113
      %p115 = scmp.ne.s32.totalorder %s107, %s109
      %p116 = scmp.eq.s32.totalorder %s26, 1
      %p117 = por %p115, %p116
      %p118 = scmp.ne.s32.totalorder %s109, %s110
      %p119 = scmp.eq.s32.totalorder %s26, 0
      %p120 = por %p118, %p119
      %p121 = scmp.ne.s32.totalorder %s109, %s110
      %p122 = scmp.eq.s32.totalorder %s27, 1
      %p123 = por %p121, %p122
      %p125 = scmp.ne.s32.totalorder %s110, %s124
      %p126 = scmp.eq.s32.totalorder %s27, 0
      %p127 = por %p125, %p126
      %s129 = sadd.s32 %s128, 1
      %p132 = scmp.eq.s32.totalorder %s21, 1
      %p133 = scmp.ne.s32.totalorder %s128, %s130
      %p134 = scmp.eq.s32.totalorder %s21, 0
      %p135 = por %p133, %p134
      %p136 = scmp.ne.s32.totalorder %s128, %s130
      %p137 = scmp.eq.s32.totalorder %s26, 1
      %p138 = por %p136, %p137
      %p139 = scmp.ne.s32.totalorder %s130, %s131
      %p140 = scmp.eq.s32.totalorder %s26, 0
      %p141 = por %p139, %p140
      %p142 = scmp.ne.s32.totalorder %s130, %s131
      %p143 = scmp.eq.s32.totalorder %s27, 1
      %p144 = por %p142, %p143
      %p146 = scmp.ne.s32.totalorder %s131, %s145
      %p147 = scmp.eq.s32.totalorder %s27, 0
      %p148 = por %p146, %p147
      %s149 = ssub.s32 %s21, %s28
      %p150 = scmp.eq.s32.totalorder %s149, 0
      %s152 = sadd.s32 %s151, 1
      %s153 = scalar_select %p150, %s151, %s152
      %p156 = pneg %p150
      %p157 = scmp.eq.s32.totalorder %s21, 1
      %p158 = por %p156, %p157
      %p159 = scmp.ne.s32.totalorder %s151, %s154
      %p160 = scmp.eq.s32.totalorder %s21, 0
      %p161 = por %p159, %p160
      %p162 = scmp.ne.s32.totalorder %s151, %s154
      %p163 = scmp.eq.s32.totalorder %s26, 1
      %p164 = por %p162, %p163
      %p165 = scmp.ne.s32.totalorder %s154, %s155
      %p166 = scmp.eq.s32.totalorder %s26, 0
      %p167 = por %p165, %p166
      %p168 = scmp.ne.s32.totalorder %s154, %s155
      %p169 = scmp.eq.s32.totalorder %s27, 1
      %p170 = por %p168, %p169
      %p172 = scmp.ne.s32.totalorder %s155, %s171
      %p173 = scmp.eq.s32.totalorder %s27, 0
      %p174 = por %p172, %p173
      %p175 = scmp.le.s32.totalorder 1, %s21
      %p176 = scmp.lt.s32.totalorder %s21, 3
      %p177 = pnand %p175, %p176
      %p178 = pneg %p177
      // Predicated region
      $region9: #{tpu_custom_call.1} parent=5 // pred_check
        _
      $region10: #{tpu_custom_call.1} parent=5 // pred_check_branch
        %180 = sbr.rel (%p177) target = $region12
      $region11: #{tpu_custom_call.1} parent=5 // pred_region
        %s181 = ssub.s32 %s21, 1
        // Predicated region
        $region13: #{tpu_custom_call.1} parent=11 // pred_check
          %p182 = pneg %p120
        $region14: #{tpu_custom_call.1} parent=11 // pred_check_branch
          %184 = sbr.rel (%p182) target = $region16
        $region15: #{tpu_custom_call.1} parent=11 // pred_region
          %s186 = ssub.s32 2560, 2560
          %187 = vsyncadd [#allocation6], %s186
          %s188 = sshll.u32 [#allocation7], 4
          %s189 = int_to_ptr.vmem [resolvable:$true] %s188
          %194 = dma.hbm_to_vmem [thread:$0]  %s3, 2560, %s189, [#allocation6], 128, 128, 8
        $region16: #{tpu_custom_call.1} parent=11 // pred_fallthru
          _
        // Predicated region
        $region17: #{tpu_custom_call.1} parent=11 // pred_check
          %p195 = pneg %p141
        $region18: #{tpu_custom_call.1} parent=11 // pred_check_branch
          %197 = sbr.rel (%p195) target = $region20
        $region19: #{tpu_custom_call.1} parent=11 // pred_region
          %s199 = ssub.s32 256, 256
          %200 = vsyncadd [#allocation9], %s199
          %s201 = sshll.u32 [#allocation8], 4
          %s202 = int_to_ptr.vmem [resolvable:$true] %s201
          %207 = dma.hbm_to_vmem [thread:$0]  %s4, 256, %s202, [#allocation9], 128, 128, 8
        $region20: #{tpu_custom_call.1} parent=11 // pred_fallthru
          _
      $region12: #{tpu_custom_call.1} parent=5 // pred_fallthru
        _
      %p208 = scmp.lt.s32.totalorder %s21, 2
      // Predicated region
      $region21: #{tpu_custom_call.1} parent=5 // pred_check
        %p209 = pneg %p208
      $region22: #{tpu_custom_call.1} parent=5 // pred_check_branch
        %211 = sbr.rel (%p209) target = $region24
      $region23: #{tpu_custom_call.1} parent=5 // pred_region
        // Predicated region
        $region25: #{tpu_custom_call.1} parent=23 // pred_check
          %p212 = pneg %p41
        $region26: #{tpu_custom_call.1} parent=23 // pred_check_branch
          %214 = sbr.rel (%p212) target = $region28
        $region27: #{tpu_custom_call.1} parent=23 // pred_region
          %s215 = sand.u32 %s31, 1
          %s216 = scalar_lea.sflag [#allocation3], %s215
          %s217 = sand.u32 %s31, 1
          %s218 = smul.addr %s217, 8
          %s219 = scalar_lea.vmem [#allocation2], %s218
          %s221 = ssub.s32 128, 128
          %222 = vsyncadd %s216, %s221
          %s223 = smul.addr %s21, 128
          %s224 = scalar_lea.hbm %s0, %s223
          %s226 = sshll.u32 %s219, 4
          %s227 = int_to_ptr.vmem [resolvable:$true] %s226
          %229 = dma.hbm_to_vmem [thread:$0]  %s224, 128, %s227, %s216
        $region28: #{tpu_custom_call.1} parent=23 // pred_fallthru
          _
        // Predicated region
        $region29: #{tpu_custom_call.1} parent=23 // pred_check
          %p230 = pneg %p67
        $region30: #{tpu_custom_call.1} parent=23 // pred_check_branch
          %232 = sbr.rel (%p230) target = $region32
        $region31: #{tpu_custom_call.1} parent=23 // pred_region
          %s233 = sand.u32 %s21, 1
          %s234 = scalar_lea.sflag [#allocation6], %s233
          %s235 = sand.u32 %s57, 1
          %s236 = smul.addr %s235, 8
          %s237 = scalar_lea.vmem [#allocation5], %s236
          %s239 = ssub.s32 128, 128
          %240 = vsyncadd %s234, %s239
          %s241 = smul.addr %s21, 128
          %s242 = scalar_lea.hbm %s1, %s241
          %s244 = sshll.u32 %s237, 4
          %s245 = int_to_ptr.vmem [resolvable:$true] %s244
          %247 = dma.hbm_to_vmem [thread:$0]  %s242, 128, %s245, %s234
        $region32: #{tpu_custom_call.1} parent=23 // pred_fallthru
          _
        // Predicated region
        $region33: #{tpu_custom_call.1} parent=23 // pred_check
          %p248 = pneg %p93
        $region34: #{tpu_custom_call.1} parent=23 // pred_check_branch
          %250 = sbr.rel (%p248) target = $region36
        $region35: #{tpu_custom_call.1} parent=23 // pred_region
          %p251 = scmp.lt.s32.totalorder %s21, 1
          %s252 = scalar_select %p251, %s21, 1
          %s253 = scalar_lea.vmem %s2, %s252
        $region36: #{tpu_custom_call.1} parent=23 // pred_fallthru
          _
      $region24: #{tpu_custom_call.1} parent=5 // pred_fallthru
        _
      %p254 = scmp.le.s32.totalorder 1, %s21
      %p255 = scmp.lt.s32.totalorder %s21, 3
      %p256 = pnand %p254, %p255
      %p257 = pneg %p256
      // Predicated region
      $region37: #{tpu_custom_call.1} parent=5 // pred_check
        _
      $region38: #{tpu_custom_call.1} parent=5 // pred_check_branch
        %259 = sbr.rel (%p256) target = $region40
      $region39: #{tpu_custom_call.1} parent=5 // pred_region
        %s260 = ssub.s32 %s21, 1
        %s261 = sand.u32 %s34, 1
        %s262 = scalar_lea.sflag [#allocation3], %s261
        %s263 = sand.u32 %s34, 1
        %s264 = smul.addr %s263, 8
        %s265 = scalar_lea.vmem [#allocation2], %s264
        // Predicated region
        $region41: #{tpu_custom_call.1} parent=39 // pred_check
          %p266 = pneg %p47
        $region42: #{tpu_custom_call.1} parent=39 // pred_check_branch
          %268 = sbr.rel (%p266) target = $region44
        $region43: #{tpu_custom_call.1} parent=39 // pred_region
          %269 = dma.done %s262, 128
        $region44: #{tpu_custom_call.1} parent=39 // pred_fallthru
          _
        %s270 = sand.u32 %s26, 1
        %s271 = scalar_lea.sflag [#allocation6], %s270
        %s272 = sand.u32 %s60, 1
        %s273 = smul.addr %s272, 8
        %s274 = scalar_lea.vmem [#allocation5], %s273
        // Predicated region
        $region45: #{tpu_custom_call.1} parent=39 // pred_check
          %p275 = pneg %p73
        $region46: #{tpu_custom_call.1} parent=39 // pred_check_branch
          %277 = sbr.rel (%p275) target = $region48
        $region47: #{tpu_custom_call.1} parent=39 // pred_region
          %278 = dma.done %s271, 128
        $region48: #{tpu_custom_call.1} parent=39 // pred_fallthru
          _
        // Predicated region
        $region49: #{tpu_custom_call.1} parent=39 // pred_check
          %p279 = pneg %p120
        $region50: #{tpu_custom_call.1} parent=39 // pred_check_branch
          %281 = sbr.rel (%p279) target = $region52
        $region51: #{tpu_custom_call.1} parent=39 // pred_region
          %282 = dma.done [#allocation6], 2560
        $region52: #{tpu_custom_call.1} parent=39 // pred_fallthru
          _
        // Predicated region
        $region53: #{tpu_custom_call.1} parent=39 // pred_check
          %p283 = pneg %p141
        $region54: #{tpu_custom_call.1} parent=39 // pred_check_branch
          %285 = sbr.rel (%p283) target = $region56
        $region55: #{tpu_custom_call.1} parent=39 // pred_region
          %286 = dma.done [#allocation9], 256
        $region56: #{tpu_custom_call.1} parent=39 // pred_fallthru
          _
        %s287 = sand.u32 %s34, 1
        %s288 = scalar_lea.sflag [#allocation3], %s287
        %s289 = sand.u32 %s34, 1
        %s290 = smul.addr %s289, 8
        %s291 = scalar_lea.vmem [#allocation2], %s290
        %p292 = pneg %p47
        %p293 = pneg %p44
        %s294 = sand.u32 %s26, 1
        %s295 = scalar_lea.sflag [#allocation6], %s294
        %s296 = sand.u32 %s60, 1
        %s297 = smul.addr %s296, 8
        %s298 = scalar_lea.vmem [#allocation5], %s297
        %p299 = pneg %p73
        %p300 = pneg %p70
        %p301 = scmp.lt.s32.totalorder %s26, 1
        %s302 = scalar_select %p301, %s26, 1
        %s303 = scalar_lea.vmem %s2, %s302
        %p304 = pneg %p99
        %p305 = pneg %p96
        %p306 = pneg %p120
        %p307 = pneg %p117
        %p308 = pneg %p141
        %p309 = pneg %p138
        %p310 = pneg %p167
        %p311 = pneg %p164
        %s312 = sand.u32 %s154, 1
        %s313 = scalar_lea.sflag [#allocation4], %s312
        %s314 = sand.u32 %s154, 1
        %s315 = smul.addr %s314, 8
        %s316 = scalar_lea.vmem [#allocation10], %s315
        %p317 = scmp.lt.s32.totalorder %s26, 1
        %s318 = scalar_select %p317, %s26, 1
        %s319 = scalar_lea.vmem %s2, %s318
        %v320 = vld [vmem:[#allocation8 + $0x5] sm:$0x1]
        %v321 = vld [vmem:[#allocation8 + $0x6] sm:$0x1]
        %v322 = vld [vmem:[%s265] sm:$0xff]
        %vm323 = vcmask 261120
        %v324 = vsel %vm323, %v322, 0.0
        %325 = vadd.xlane.f32.xlu0 %v324
        %v326 = vpop.xlane.xlu0 %325
        %v327 = vrcp.pop 32.0
        %v328 = vmul.f32 %v326, %v327
        %v329 = vsub.f32 %v322, %v328
        %v330 = vmul.f32 %v329, %v329
        %v331 = vsel %vm323, %v330, 0.0
        %332 = vadd.xlane.f32.xlu0 %v331
        %v333 = vpop.xlane.xlu0 %332
        %v334 = vmul.f32 %v333, %v327
        %v335 = vadd.f32 %v334, 1e-05
        %v336 = vrsqrt.pop %v335
        %v337 = vmul.f32 %v329, %v336
        %v338 = vlaneseq
        %v339 = vshrl.u32 %v338, 7
        %v340 = vsub.s32 0, %v339
        %v341 = vrot.slane %v320, %v340
        %v342 = vmul.f32 %v337, %v341
        %v343 = vlaneseq
        %v344 = vshrl.u32 %v343, 7
        %v345 = vsub.s32 0, %v344
        %v346 = vrot.slane %v321, %v345
        %v347 = vadd.f32 %v342, %v346
        %v348 = vld [vmem:[%s274] sm:$0xff]
        %v349 = vsel %vm323, %v348, 0.0
        %350 = vadd.xlane.f32.xlu0 %v349
        %v351 = vpop.xlane.xlu0 %350
        %v352 = vmul.f32 %v351, %v327
        %v353 = vsub.f32 %v348, %v352
        %v354 = vmul.f32 %v353, %v353
        %v355 = vsel %vm323, %v354, 0.0
        %356 = vadd.xlane.f32.xlu0 %v355
        %v357 = vpop.xlane.xlu0 %356
        %v358 = vmul.f32 %v357, %v327
        %v359 = vadd.f32 %v358, 1e-05
        %v360 = vrsqrt.pop %v359
        %v361 = vmul.f32 %v353, %v360
        %v362 = vmul.f32 %v361, %v341
        %v363 = vadd.f32 %v362, %v346
        %v364 = vld [vmem:[#allocation7] sm:$0xff]
        %v365 = vld [vmem:[#allocation7 + $0x8] sm:$0xff]
        %v366 = vld [vmem:[#allocation7 + $0x10] sm:$0xff]
        %v367 = vld [vmem:[#allocation7 + $0x18] sm:$0xff]
        %v368 = vld [vmem:[#allocation8] sm:$0x1]
        %v369 = vlaneseq
        %v370 = vshrl.u32 %v369, 7
        %v371 = vsub.s32 0, %v370
        %v372 = vrot.slane %v368, %v371
        %v374 = vsel %vm323, %v347, 0
        %376 = vmatprep.subr.mxu0 0.0
        %377 = vmatpush1.msra.mxu0 %v364
        %378 = vmatprep.subr.mxu0 0.0
        %379 = vmatpush1.msra.mxu0 %v365
        %380 = vmatprep.subr.mxu0 0.0
        %381 = vmatpush1.msra.mxu0 %v366
        %382 = vmatprep.subr.mxu0 0.0
        %383 = vmatpush1.msra.mxu0 %v367
        %384 = vmatprep.subr.mxu0 0.0
        %385 = vmatpush1.msra.mxu0 0.0
        %386 = vmatprep.subr.mxu0 0.0
        %387 = vmatpush1.msra.mxu0 0.0
        %388 = vmatprep.subr.mxu0 0.0
        %389 = vmatpush1.msra.mxu0 0.0
        %390 = vmatprep.subr.mxu0 0.0
        %391 = vmatpush1.msra.mxu0 0.0
        %392 = vmatprep.subr.mxu0 0.0
        %393 = vmatpush1.msra.mxu0 0.0
        %394 = vmatprep.subr.mxu0 0.0
        %395 = vmatpush1.msra.mxu0 0.0
        %396 = vmatprep.subr.mxu0 0.0
        %397 = vmatpush1.msra.mxu0 0.0
        %398 = vmatprep.subr.mxu0 0.0
        %399 = vmatpush1.msra.mxu0 0.0
        %400 = vmatprep.subr.mxu0 0.0
        %401 = vmatpush1.msra.mxu0 0.0
        %402 = vmatprep.subr.mxu0 0.0
        %403 = vmatpush1.msra.mxu0 0.0
        %404 = vmatprep.subr.mxu0 0.0
        %405 = vmatpush1.msra.mxu0 0.0
        %406 = vmatprep.subr.mxu0 0.0
        %407 = vmatpush1.msra.mxu0 0.0
        %408 = vmatprep.subr.mxu0 0.0
        %409 = vmatpush1.msra.mxu0 0.0
        %410 = vmatprep.subr.mxu0 0.0
        %411 = vmatpush1.msra.mxu0 0.0
        %412 = vmatprep.subr.mxu0 0.0
        %413 = vmatpush1.msra.mxu0 0.0
        %414 = vmatprep.subr.mxu0 0.0
        %415 = vmatpush1.msra.mxu0 0.0
        %416 = vmatprep.subr.mxu0 0.0
        %417 = vmatpush1.msra.mxu0 0.0
        %418 = vmatprep.subr.mxu0 0.0
        %419 = vmatpush1.msra.mxu0 0.0
        %420 = vmatprep.subr.mxu0 0.0
        %421 = vmatpush1.msra.mxu0 0.0
        %422 = vmatprep.subr.mxu0 0.0
        %423 = vmatpush1.msra.mxu0 0.0
        %424 = vmatprep.subr.mxu0 0.0
        %425 = vmatpush1.msra.mxu0 0.0
        %426 = vmatprep.subr.mxu0 0.0
        %427 = vmatpush1.msra.mxu0 0.0
        %428 = vmatprep.subr.mxu0 0.0
        %429 = vmatpush1.msra.mxu0 0.0
        %430 = vmatprep.subr.mxu0 0.0
        %431 = vmatpush1.msra.mxu0 0.0
        %432 = vmatprep.subr.mxu0 0.0
        %433 = vmatpush1.msra.mxu0 0.0
        %434 = vmatprep.subr.mxu0 0.0
        %435 = vmatpush1.msra.mxu0 0.0
        %436 = vmatprep.subr.mxu0 0.0
        %437 = vmatpush1.msra.mxu0 0.0
        %438 = vmatprep.subr.mxu0 0.0
        %439 = vmatpush1.msra.mxu0 0.0
        %440 = vmatprep.mubr.f32.mxu0 0.0
        %441 = vmatmul.mubr.f32.gmra.mrb[0].mxu0 %v374
        %v442 = vpop.f32.mrb[0].mxu0
        %v443 = vadd.f32 %v372, %v442
        %v444 = vpop.f32.mrb[0].mxu0
        %445 = vdwg.mxu0
        %s446 = scalar_lea.vmem [#allocation7], 32
        %v447 = vld [vmem:[%s446] sm:$0xff]
        %v448 = vld [vmem:[%s446 + $0x8] sm:$0xff]
        %v449 = vld [vmem:[%s446 + $0x10] sm:$0xff]
        %v450 = vld [vmem:[%s446 + $0x18] sm:$0xff]
        %v451 = vld [vmem:[#allocation8 + $0x1] sm:$0x1]
        %v452 = vlaneseq
        %v453 = vshrl.u32 %v452, 7
        %v454 = vsub.s32 0, %v453
        %v455 = vrot.slane %v451, %v454
        %v457 = vsel %vm323, %v363, 0
        %459 = vmatprep.subr.mxu0 0.0
        %460 = vmatpush1.msra.mxu0 %v447
        %461 = vmatprep.subr.mxu0 0.0
        %462 = vmatpush1.msra.mxu0 %v448
        %463 = vmatprep.subr.mxu0 0.0
        %464 = vmatpush1.msra.mxu0 %v449
        %465 = vmatprep.subr.mxu0 0.0
        %466 = vmatpush1.msra.mxu0 %v450
        %467 = vmatprep.subr.mxu0 0.0
        %468 = vmatpush1.msra.mxu0 0.0
        %469 = vmatprep.subr.mxu0 0.0
        %470 = vmatpush1.msra.mxu0 0.0
        %471 = vmatprep.subr.mxu0 0.0
        %472 = vmatpush1.msra.mxu0 0.0
        %473 = vmatprep.subr.mxu0 0.0
        %474 = vmatpush1.msra.mxu0 0.0
        %475 = vmatprep.subr.mxu0 0.0
        %476 = vmatpush1.msra.mxu0 0.0
        %477 = vmatprep.subr.mxu0 0.0
        %478 = vmatpush1.msra.mxu0 0.0
        %479 = vmatprep.subr.mxu0 0.0
        %480 = vmatpush1.msra.mxu0 0.0
        %481 = vmatprep.subr.mxu0 0.0
        %482 = vmatpush1.msra.mxu0 0.0
        %483 = vmatprep.subr.mxu0 0.0
        %484 = vmatpush1.msra.mxu0 0.0
        %485 = vmatprep.subr.mxu0 0.0
        %486 = vmatpush1.msra.mxu0 0.0
        %487 = vmatprep.subr.mxu0 0.0
        %488 = vmatpush1.msra.mxu0 0.0
        %489 = vmatprep.subr.mxu0 0.0
        %490 = vmatpush1.msra.mxu0 0.0
        %491 = vmatprep.subr.mxu0 0.0
        %492 = vmatpush1.msra.mxu0 0.0
        %493 = vmatprep.subr.mxu0 0.0
        %494 = vmatpush1.msra.mxu0 0.0
        %495 = vmatprep.subr.mxu0 0.0
        %496 = vmatpush1.msra.mxu0 0.0
        %497 = vmatprep.subr.mxu0 0.0
        %498 = vmatpush1.msra.mxu0 0.0
        %499 = vmatprep.subr.mxu0 0.0
        %500 = vmatpush1.msra.mxu0 0.0
        %501 = vmatprep.subr.mxu0 0.0
        %502 = vmatpush1.msra.mxu0 0.0
        %503 = vmatprep.subr.mxu0 0.0
        %504 = vmatpush1.msra.mxu0 0.0
        %505 = vmatprep.subr.mxu0 0.0
        %506 = vmatpush1.msra.mxu0 0.0
        %507 = vmatprep.subr.mxu0 0.0
        %508 = vmatpush1.msra.mxu0 0.0
        %509 = vmatprep.subr.mxu0 0.0
        %510 = vmatpush1.msra.mxu0 0.0
        %511 = vmatprep.subr.mxu0 0.0
        %512 = vmatpush1.msra.mxu0 0.0
        %513 = vmatprep.subr.mxu0 0.0
        %514 = vmatpush1.msra.mxu0 0.0
        %515 = vmatprep.subr.mxu0 0.0
        %516 = vmatpush1.msra.mxu0 0.0
        %517 = vmatprep.subr.mxu0 0.0
        %518 = vmatpush1.msra.mxu0 0.0
        %519 = vmatprep.subr.mxu0 0.0
        %520 = vmatpush1.msra.mxu0 0.0
        %521 = vmatprep.subr.mxu0 0.0
        %522 = vmatpush1.msra.mxu0 0.0
        %523 = vmatprep.mubr.f32.mxu0 0.0
        %524 = vmatmul.mubr.f32.gmra.mrb[0].mxu0 %v457
        %v525 = vpop.f32.mrb[0].mxu0
        %v526 = vadd.f32 %v455, %v525
        %v527 = vpop.f32.mrb[0].mxu0
        %528 = vdwg.mxu0
        %s529 = scalar_lea.vmem [#allocation7], 64
        %v530 = vld [vmem:[%s529] sm:$0xff]
        %v531 = vld [vmem:[%s529 + $0x8] sm:$0xff]
        %v532 = vld [vmem:[%s529 + $0x10] sm:$0xff]
        %v533 = vld [vmem:[%s529 + $0x18] sm:$0xff]
        %v534 = vld [vmem:[#allocation8 + $0x2] sm:$0x1]
        %v535 = vlaneseq
        %v536 = vshrl.u32 %v535, 7
        %v537 = vsub.s32 0, %v536
        %v538 = vrot.slane %v534, %v537
        %539 = vmatprep.subr.mxu0 0.0
        %540 = vmatpush1.msra.mxu0 %v530
        %541 = vmatprep.subr.mxu0 0.0
        %542 = vmatpush1.msra.mxu0 %v531
        %543 = vmatprep.subr.mxu0 0.0
        %544 = vmatpush1.msra.mxu0 %v532
        %545 = vmatprep.subr.mxu0 0.0
        %546 = vmatpush1.msra.mxu0 %v533
        %547 = vmatprep.subr.mxu0 0.0
        %548 = vmatpush1.msra.mxu0 0.0
        %549 = vmatprep.subr.mxu0 0.0
        %550 = vmatpush1.msra.mxu0 0.0
        %551 = vmatprep.subr.mxu0 0.0
        %552 = vmatpush1.msra.mxu0 0.0
        %553 = vmatprep.subr.mxu0 0.0
        %554 = vmatpush1.msra.mxu0 0.0
        %555 = vmatprep.subr.mxu0 0.0
        %556 = vmatpush1.msra.mxu0 0.0
        %557 = vmatprep.subr.mxu0 0.0
        %558 = vmatpush1.msra.mxu0 0.0
        %559 = vmatprep.subr.mxu0 0.0
        %560 = vmatpush1.msra.mxu0 0.0
        %561 = vmatprep.subr.mxu0 0.0
        %562 = vmatpush1.msra.mxu0 0.0
        %563 = vmatprep.subr.mxu0 0.0
        %564 = vmatpush1.msra.mxu0 0.0
        %565 = vmatprep.subr.mxu0 0.0
        %566 = vmatpush1.msra.mxu0 0.0
        %567 = vmatprep.subr.mxu0 0.0
        %568 = vmatpush1.msra.mxu0 0.0
        %569 = vmatprep.subr.mxu0 0.0
        %570 = vmatpush1.msra.mxu0 0.0
        %571 = vmatprep.subr.mxu0 0.0
        %572 = vmatpush1.msra.mxu0 0.0
        %573 = vmatprep.subr.mxu0 0.0
        %574 = vmatpush1.msra.mxu0 0.0
        %575 = vmatprep.subr.mxu0 0.0
        %576 = vmatpush1.msra.mxu0 0.0
        %577 = vmatprep.subr.mxu0 0.0
        %578 = vmatpush1.msra.mxu0 0.0
        %579 = vmatprep.subr.mxu0 0.0
        %580 = vmatpush1.msra.mxu0 0.0
        %581 = vmatprep.subr.mxu0 0.0
        %582 = vmatpush1.msra.mxu0 0.0
        %583 = vmatprep.subr.mxu0 0.0
        %584 = vmatpush1.msra.mxu0 0.0
        %585 = vmatprep.subr.mxu0 0.0
        %586 = vmatpush1.msra.mxu0 0.0
        %587 = vmatprep.subr.mxu0 0.0
        %588 = vmatpush1.msra.mxu0 0.0
        %589 = vmatprep.subr.mxu0 0.0
        %590 = vmatpush1.msra.mxu0 0.0
        %591 = vmatprep.subr.mxu0 0.0
        %592 = vmatpush1.msra.mxu0 0.0
        %593 = vmatprep.subr.mxu0 0.0
        %594 = vmatpush1.msra.mxu0 0.0
        %595 = vmatprep.subr.mxu0 0.0
        %596 = vmatpush1.msra.mxu0 0.0
        %597 = vmatprep.subr.mxu0 0.0
        %598 = vmatpush1.msra.mxu0 0.0
        %599 = vmatprep.subr.mxu0 0.0
        %600 = vmatpush1.msra.mxu0 0.0
        %601 = vmatprep.subr.mxu0 0.0
        %602 = vmatpush1.msra.mxu0 0.0
        %603 = vmatprep.mubr.f32.mxu0 0.0
        %604 = vmatmul.mubr.f32.gmra.mrb[0].mxu0 %v457
        %v605 = vpop.f32.mrb[0].mxu0
        %v606 = vadd.f32 %v538, %v605
        %v607 = vpop.f32.mrb[0].mxu0
        %608 = vdwg.mxu0
        %v610 = vsel %vm323, %v526, 0
        %v613 = vsel %vm323, %v443, 0
        %615 = vmatprep.subr.mxu0 0.0
        %616 = vmatpush1.xpose.msra.mxu0 %v613
        %617 = vmatprep.subr.mxu0 0.0
        %618 = vmatpush1.xpose.msra.mxu0 0.0
        %619 = vmatprep.subr.mxu0 0.0
        %620 = vmatpush1.xpose.msra.mxu0 0.0
        %621 = vmatprep.subr.mxu0 0.0
        %622 = vmatpush1.xpose.msra.mxu0 0.0
        %623 = vmatprep.subr.mxu0 0.0
        %624 = vmatpush1.xpose.msra.mxu0 0.0
        %625 = vmatprep.subr.mxu0 0.0
        %626 = vmatpush1.xpose.msra.mxu0 0.0
        %627 = vmatprep.subr.mxu0 0.0
        %628 = vmatpush1.xpose.msra.mxu0 0.0
        %629 = vmatprep.subr.mxu0 0.0
        %630 = vmatpush1.xpose.msra.mxu0 0.0
        %631 = vmatprep.subr.mxu0 0.0
        %632 = vmatpush1.xpose.msra.mxu0 0.0
        %633 = vmatprep.subr.mxu0 0.0
        %634 = vmatpush1.xpose.msra.mxu0 0.0
        %635 = vmatprep.subr.mxu0 0.0
        %636 = vmatpush1.xpose.msra.mxu0 0.0
        %637 = vmatprep.subr.mxu0 0.0
        %638 = vmatpush1.xpose.msra.mxu0 0.0
        %639 = vmatprep.subr.mxu0 0.0
        %640 = vmatpush1.xpose.msra.mxu0 0.0
        %641 = vmatprep.subr.mxu0 0.0
        %642 = vmatpush1.xpose.msra.mxu0 0.0
        %643 = vmatprep.subr.mxu0 0.0
        %644 = vmatpush1.xpose.msra.mxu0 0.0
        %645 = vmatprep.subr.mxu0 0.0
        %646 = vmatpush1.xpose.msra.mxu0 0.0
        %647 = vmatprep.subr.mxu0 0.0
        %648 = vmatpush1.xpose.msra.mxu0 0.0
        %649 = vmatprep.subr.mxu0 0.0
        %650 = vmatpush1.xpose.msra.mxu0 0.0
        %651 = vmatprep.subr.mxu0 0.0
        %652 = vmatpush1.xpose.msra.mxu0 0.0
        %653 = vmatprep.subr.mxu0 0.0
        %654 = vmatpush1.xpose.msra.mxu0 0.0
        %655 = vmatprep.subr.mxu0 0.0
        %656 = vmatpush1.xpose.msra.mxu0 0.0
        %657 = vmatprep.subr.mxu0 0.0
        %658 = vmatpush1.xpose.msra.mxu0 0.0
        %659 = vmatprep.subr.mxu0 0.0
        %660 = vmatpush1.xpose.msra.mxu0 0.0
        %661 = vmatprep.subr.mxu0 0.0
        %662 = vmatpush1.xpose.msra.mxu0 0.0
        %663 = vmatprep.subr.mxu0 0.0
        %664 = vmatpush1.xpose.msra.mxu0 0.0
        %665 = vmatprep.subr.mxu0 0.0
        %666 = vmatpush1.xpose.msra.mxu0 0.0
        %667 = vmatprep.subr.mxu0 0.0
        %668 = vmatpush1.xpose.msra.mxu0 0.0
        %669 = vmatprep.subr.mxu0 0.0
        %670 = vmatpush1.xpose.msra.mxu0 0.0
        %671 = vmatprep.subr.mxu0 0.0
        %672 = vmatpush1.xpose.msra.mxu0 0.0
        %673 = vmatprep.subr.mxu0 0.0
        %674 = vmatpush1.xpose.msra.mxu0 0.0
        %675 = vmatprep.subr.mxu0 0.0
        %676 = vmatpush1.xpose.msra.mxu0 0.0
        %677 = vmatprep.subr.mxu0 0.0
        %678 = vmatpush1.xpose.msra.mxu0 0.0
        %679 = vmatprep.mubr.f32.mxu0 0.0
        %680 = vmatmul.mubr.f32.gmra.mrb[0].mxu0 %v610
        %v681 = vpop.f32.mrb[0].mxu0
        %v682 = vadd.f32 0.0, %v681
        %v683 = vpop.f32.mrb[0].mxu0
        %684 = vdwg.mxu0
        %vm685 = vcmask 64512
        %v686 = vsel %vm685, %v682, -inf
        %687 = vmax.xlane.f32.xlu0 %v686
        %v688 = vpop.xlane.xlu0 %687
        %v689 = vsub.f32 %v682, %v688
        %v690 = vmul.f32 %v689, 1.442695
        %v691 = vpow.pop %v690
        %v692 = vsel %vm685, %v691, 0.0
        %693 = vadd.xlane.f32.xlu0 %v692
        %v694 = vpop.xlane.xlu0 %693
        %v695 = vld [vmem:[%s319] sm:$0x1]
        %v697 = vlaneseq
        %v698 = vshrl.u32 %v697, 7
        %v699 = vsub.s32 0, %v698
        %v700 = vrot.slane %v695, %v699
        %v702 = vmul.f32 %v691, %v700
        %v703 = vsel %vm685, %v702, 0.0
        %704 = vadd.xlane.f32.xlu0 %v703
        %v705 = vpop.xlane.xlu0 %704
        %v706 = vrcp.pop %v694
        %v707 = vmul.f32 %v705, %v706
        %v708 = vmul.f32 %v606, %v707
        %s709 = scalar_lea.vmem [#allocation7], 96
        %v710 = vld [vmem:[%s709] sm:$0xff]
        %v711 = vld [vmem:[%s709 + $0x8] sm:$0xff]
        %v712 = vld [vmem:[%s709 + $0x10] sm:$0xff]
        %v713 = vld [vmem:[%s709 + $0x18] sm:$0xff]
        %v714 = vld [vmem:[#allocation8 + $0x3] sm:$0x1]
        %v715 = vlaneseq
        %v716 = vshrl.u32 %v715, 7
        %v717 = vsub.s32 0, %v716
        %v718 = vrot.slane %v714, %v717
        %v720 = vsel %vm323, %v708, 0
        %722 = vmatprep.subr.mxu0 0.0
        %723 = vmatpush1.msra.mxu0 %v710
        %724 = vmatprep.subr.mxu0 0.0
        %725 = vmatpush1.msra.mxu0 %v711
        %726 = vmatprep.subr.mxu0 0.0
        %727 = vmatpush1.msra.mxu0 %v712
        %728 = vmatprep.subr.mxu0 0.0
        %729 = vmatpush1.msra.mxu0 %v713
        %730 = vmatprep.subr.mxu0 0.0
        %731 = vmatpush1.msra.mxu0 0.0
        %732 = vmatprep.subr.mxu0 0.0
        %733 = vmatpush1.msra.mxu0 0.0
        %734 = vmatprep.subr.mxu0 0.0
        %735 = vmatpush1.msra.mxu0 0.0
        %736 = vmatprep.subr.mxu0 0.0
        %737 = vmatpush1.msra.mxu0 0.0
        %738 = vmatprep.subr.mxu0 0.0
        %739 = vmatpush1.msra.mxu0 0.0
        %740 = vmatprep.subr.mxu0 0.0
        %741 = vmatpush1.msra.mxu0 0.0
        %742 = vmatprep.subr.mxu0 0.0
        %743 = vmatpush1.msra.mxu0 0.0
        %744 = vmatprep.subr.mxu0 0.0
        %745 = vmatpush1.msra.mxu0 0.0
        %746 = vmatprep.subr.mxu0 0.0
        %747 = vmatpush1.msra.mxu0 0.0
        %748 = vmatprep.subr.mxu0 0.0
        %749 = vmatpush1.msra.mxu0 0.0
        %750 = vmatprep.subr.mxu0 0.0
        %751 = vmatpush1.msra.mxu0 0.0
        %752 = vmatprep.subr.mxu0 0.0
        %753 = vmatpush1.msra.mxu0 0.0
        %754 = vmatprep.subr.mxu0 0.0
        %755 = vmatpush1.msra.mxu0 0.0
        %756 = vmatprep.subr.mxu0 0.0
        %757 = vmatpush1.msra.mxu0 0.0
        %758 = vmatprep.subr.mxu0 0.0
        %759 = vmatpush1.msra.mxu0 0.0
        %760 = vmatprep.subr.mxu0 0.0
        %761 = vmatpush1.msra.mxu0 0.0
        %762 = vmatprep.subr.mxu0 0.0
        %763 = vmatpush1.msra.mxu0 0.0
        %764 = vmatprep.subr.mxu0 0.0
        %765 = vmatpush1.msra.mxu0 0.0
        %766 = vmatprep.subr.mxu0 0.0
        %767 = vmatpush1.msra.mxu0 0.0
        %768 = vmatprep.subr.mxu0 0.0
        %769 = vmatpush1.msra.mxu0 0.0
        %770 = vmatprep.subr.mxu0 0.0
        %771 = vmatpush1.msra.mxu0 0.0
        %772 = vmatprep.subr.mxu0 0.0
        %773 = vmatpush1.msra.mxu0 0.0
        %774 = vmatprep.subr.mxu0 0.0
        %775 = vmatpush1.msra.mxu0 0.0
        %776 = vmatprep.subr.mxu0 0.0
        %777 = vmatpush1.msra.mxu0 0.0
        %778 = vmatprep.subr.mxu0 0.0
        %779 = vmatpush1.msra.mxu0 0.0
        %780 = vmatprep.subr.mxu0 0.0
        %781 = vmatpush1.msra.mxu0 0.0
        %782 = vmatprep.subr.mxu0 0.0
        %783 = vmatpush1.msra.mxu0 0.0
        %784 = vmatprep.subr.mxu0 0.0
        %785 = vmatpush1.msra.mxu0 0.0
        %786 = vmatprep.mubr.f32.mxu0 0.0
        %787 = vmatmul.mubr.f32.gmra.mrb[0].mxu0 %v720
        %v788 = vpop.f32.mrb[0].mxu0
        %v789 = vadd.f32 %v718, %v788
        %v790 = vpop.f32.mrb[0].mxu0
        %791 = vdwg.mxu0
        %v792 = vld [vmem:[#allocation8 + $0x7] sm:$0x1]
        %v793 = vld [vmem:[#allocation8 + $0x8] sm:$0x1]
        %v794 = vsel %vm323, %v789, 0.0
        %795 = vadd.xlane.f32.xlu0 %v794
        %v796 = vpop.xlane.xlu0 %795
        %v797 = vmul.f32 %v796, %v327
        %v798 = vsub.f32 %v789, %v797
        %v799 = vmul.f32 %v798, %v798
        %v800 = vsel %vm323, %v799, 0.0
        %801 = vadd.xlane.f32.xlu0 %v800
        %v802 = vpop.xlane.xlu0 %801
        %v803 = vmul.f32 %v802, %v327
        %v804 = vadd.f32 %v803, 1e-05
        %v805 = vrsqrt.pop %v804
        %v806 = vmul.f32 %v798, %v805
        %v807 = vlaneseq
        %v808 = vshrl.u32 %v807, 7
        %v809 = vsub.s32 0, %v808
        %v810 = vrot.slane %v792, %v809
        %v811 = vmul.f32 %v806, %v810
        %v812 = vlaneseq
        %v813 = vshrl.u32 %v812, 7
        %v814 = vsub.s32 0, %v813
        %v815 = vrot.slane %v793, %v814
        %v816 = vadd.f32 %v811, %v815
        %s817 = scalar_lea.vmem [#allocation7], 128
        %v818 = vld [vmem:[%s817] sm:$0xff]
        %v819 = vld [vmem:[%s817 + $0x8] sm:$0xff]
        %v820 = vld [vmem:[%s817 + $0x10] sm:$0xff]
        %v821 = vld [vmem:[%s817 + $0x18] sm:$0xff]
        %v822 = vld [vmem:[#allocation8 + $0x4] sm:$0x1]
        %v823 = vlaneseq
        %v824 = vshrl.u32 %v823, 7
        %v825 = vsub.s32 0, %v824
        %v826 = vrot.slane %v822, %v825
        %v828 = vsel %vm323, %v816, 0
        %830 = vmatprep.subr.mxu0 0.0
        %831 = vmatpush1.msra.mxu0 %v818
        %832 = vmatprep.subr.mxu0 0.0
        %833 = vmatpush1.msra.mxu0 %v819
        %834 = vmatprep.subr.mxu0 0.0
        %835 = vmatpush1.msra.mxu0 %v820
        %836 = vmatprep.subr.mxu0 0.0
        %837 = vmatpush1.msra.mxu0 %v821
        %838 = vmatprep.subr.mxu0 0.0
        %839 = vmatpush1.msra.mxu0 0.0
        %840 = vmatprep.subr.mxu0 0.0
        %841 = vmatpush1.msra.mxu0 0.0
        %842 = vmatprep.subr.mxu0 0.0
        %843 = vmatpush1.msra.mxu0 0.0
        %844 = vmatprep.subr.mxu0 0.0
        %845 = vmatpush1.msra.mxu0 0.0
        %846 = vmatprep.subr.mxu0 0.0
        %847 = vmatpush1.msra.mxu0 0.0
        %848 = vmatprep.subr.mxu0 0.0
        %849 = vmatpush1.msra.mxu0 0.0
        %850 = vmatprep.subr.mxu0 0.0
        %851 = vmatpush1.msra.mxu0 0.0
        %852 = vmatprep.subr.mxu0 0.0
        %853 = vmatpush1.msra.mxu0 0.0
        %854 = vmatprep.subr.mxu0 0.0
        %855 = vmatpush1.msra.mxu0 0.0
        %856 = vmatprep.subr.mxu0 0.0
        %857 = vmatpush1.msra.mxu0 0.0
        %858 = vmatprep.subr.mxu0 0.0
        %859 = vmatpush1.msra.mxu0 0.0
        %860 = vmatprep.subr.mxu0 0.0
        %861 = vmatpush1.msra.mxu0 0.0
        %862 = vmatprep.subr.mxu0 0.0
        %863 = vmatpush1.msra.mxu0 0.0
        %864 = vmatprep.subr.mxu0 0.0
        %865 = vmatpush1.msra.mxu0 0.0
        %866 = vmatprep.subr.mxu0 0.0
        %867 = vmatpush1.msra.mxu0 0.0
        %868 = vmatprep.subr.mxu0 0.0
        %869 = vmatpush1.msra.mxu0 0.0
        %870 = vmatprep.subr.mxu0 0.0
        %871 = vmatpush1.msra.mxu0 0.0
        %872 = vmatprep.subr.mxu0 0.0
        %873 = vmatpush1.msra.mxu0 0.0
        %874 = vmatprep.subr.mxu0 0.0
        %875 = vmatpush1.msra.mxu0 0.0
        %876 = vmatprep.subr.mxu0 0.0
        %877 = vmatpush1.msra.mxu0 0.0
        %878 = vmatprep.subr.mxu0 0.0
        %879 = vmatpush1.msra.mxu0 0.0
        %880 = vmatprep.subr.mxu0 0.0
        %881 = vmatpush1.msra.mxu0 0.0
        %882 = vmatprep.subr.mxu0 0.0
        %883 = vmatpush1.msra.mxu0 0.0
        %884 = vmatprep.subr.mxu0 0.0
        %885 = vmatpush1.msra.mxu0 0.0
        %886 = vmatprep.subr.mxu0 0.0
        %887 = vmatpush1.msra.mxu0 0.0
        %888 = vmatprep.subr.mxu0 0.0
        %889 = vmatpush1.msra.mxu0 0.0
        %890 = vmatprep.subr.mxu0 0.0
        %891 = vmatpush1.msra.mxu0 0.0
        %892 = vmatprep.subr.mxu0 0.0
        %893 = vmatpush1.msra.mxu0 0.0
        %894 = vmatprep.mubr.f32.mxu0 0.0
        %895 = vmatmul.mubr.f32.gmra.mrb[0].mxu0 %v828
        %v896 = vpop.f32.mrb[0].mxu0
        %v897 = vadd.f32 %v826, %v896
        %v898 = vpop.f32.mrb[0].mxu0
        %899 = vdwg.mxu0
        %v900 = vadd.f32 %v816, %v897
        %v901 = vld [vmem:[#allocation8 + $0x9] sm:$0x1]
        %v902 = vld [vmem:[#allocation8 + $0xa] sm:$0x1]
        %v903 = vsel %vm323, %v900, 0.0
        %904 = vadd.xlane.f32.xlu0 %v903
        %v905 = vpop.xlane.xlu0 %904
        %v906 = vmul.f32 %v905, %v327
        %v907 = vsub.f32 %v900, %v906
        %v908 = vmul.f32 %v907, %v907
        %v909 = vsel %vm323, %v908, 0.0
        %910 = vadd.xlane.f32.xlu0 %v909
        %v911 = vpop.xlane.xlu0 %910
        %v912 = vmul.f32 %v911, %v327
        %v913 = vadd.f32 %v912, 1e-05
        %v914 = vrsqrt.pop %v913
        %v915 = vmul.f32 %v907, %v914
        %v916 = vlaneseq
        %v917 = vshrl.u32 %v916, 7
        %v918 = vsub.s32 0, %v917
        %v919 = vrot.slane %v901, %v918
        %v920 = vmul.f32 %v915, %v919
        %v921 = vlaneseq
        %v922 = vshrl.u32 %v921, 7
        %v923 = vsub.s32 0, %v922
        %v924 = vrot.slane %v902, %v923
        %v925 = vadd.f32 %v920, %v924
        %926 = vst.msk [vmem:[%s316] sm:$0xff] %vm323, %v925
        %s927 = sand.u32 %s154, 1
        %s928 = scalar_lea.sflag [#allocation4], %s927
        %s929 = sand.u32 %s154, 1
        %s930 = smul.addr %s929, 8
        %s931 = scalar_lea.vmem [#allocation10], %s930
        // Predicated region
        $region57: #{tpu_custom_call.1} parent=39 // pred_check
          %p932 = pneg %p164
        $region58: #{tpu_custom_call.1} parent=39 // pred_check_branch
          %934 = sbr.rel (%p932) target = $region60
        $region59: #{tpu_custom_call.1} parent=39 // pred_region
          %s936 = ssub.s32 128, 128
          %937 = vsyncadd %s928, %s936
          %s938 = smul.addr %s26, 128
          %s939 = scalar_lea.hbm %s5, %s938
          %s941 = sshll.u32 %s931, 4
          %s942 = int_to_ptr.vmem [resolvable:$true] %s941
          %944 = dma.vmem_to_hbm [thread:$0]  %s942, 128, %s939, %s928
        $region60: #{tpu_custom_call.1} parent=39 // pred_fallthru
          _
      $region40: #{tpu_custom_call.1} parent=5 // pred_fallthru
        _
      %p945 = scmp.le.s32.totalorder 2, %s21
      // Predicated region
      $region61: #{tpu_custom_call.1} parent=5 // pred_check
        %p946 = pneg %p945
      $region62: #{tpu_custom_call.1} parent=5 // pred_check_branch
        %948 = sbr.rel (%p946) target = $region64
      $region63: #{tpu_custom_call.1} parent=5 // pred_region
        %s949 = ssub.s32 %s21, 2
        // Predicated region
        $region65: #{tpu_custom_call.1} parent=63 // pred_check
          %p950 = pneg %p170
        $region66: #{tpu_custom_call.1} parent=63 // pred_check_branch
          %952 = sbr.rel (%p950) target = $region68
        $region67: #{tpu_custom_call.1} parent=63 // pred_region
          %s953 = sand.u32 %s155, 1
          %s954 = scalar_lea.sflag [#allocation4], %s953
          %s955 = sand.u32 %s155, 1
          %s956 = smul.addr %s955, 8
          %s957 = scalar_lea.vmem [#allocation10], %s956
          %958 = dma.done %s954, 128
        $region68: #{tpu_custom_call.1} parent=63 // pred_fallthru
          _
      $region64: #{tpu_custom_call.1} parent=5 // pred_fallthru
        _
    $region6: #{tpu_custom_call.1} parent=1 // loop_footer
      %s25 = sadd.s32 1, %s21
    $region7: #{tpu_custom_call.1} parent=1 // loop_footer_branch
      %20 = sbr.rel target = $region3
    $region8: #{tpu_custom_call.1} parent=1 // loop_exit
      _
    %959 = vsyncpa [#allocation3], 1
    %s960 = scalar_lea.sflag [#allocation3], 1
    %961 = vsyncpa %s960, 1
    %962 = vsyncpa [#allocation6], 1
    %s963 = scalar_lea.sflag [#allocation6], 1
    %964 = vsyncpa %s963, 1
    %965 = vsyncpa [#allocation9], 1
    %966 = vsyncpa [#allocation4], 1
    %s967 = scalar_lea.sflag [#allocation4], 1
    %968 = vsyncpa %s967, 1

// kernel: tpu_custom_call.1
$region0: #{tpu_custom_call.1}
  #allocation0 [shape = 'u32[]', space=smem, size = 0x4, offset = 0x4, fixed_abs, tag = 'smem constant byte address 0x4 - core index']
  #allocation1 [shape = 'u32[144,128]{1,0:T(1,128)}', space=vmem, size = 0x12000, scoped, tag = 'internal scratch']
  %s0 = inlined_call_operand.hbm [shape: f32[16,32], index: 0, kind: input, shape index: {}]
  %s1 = inlined_call_operand.hbm [shape: f32[16,32], index: 1, kind: input, shape index: {}]
  %s2 = inlined_call_operand.vmem [shape: f32[2,1,8], index: 2, kind: input, shape index: {}]
  %s3 = inlined_call_operand.hbm [shape: f32[5,32,32], index: 3, kind: input, shape index: {}]
  %s4 = inlined_call_operand.hbm [shape: f32[16,32], index: 4, kind: input, shape index: {}]
  %s5 = inlined_call_operand.hbm [shape: f32[16,32], index: 5, kind: output, shape index: {}]
  %s6 = sld [smem:[#allocation0]]
  $region69: #{tpu_custom_call.1} parent=0
    _
  %s8 = ssub.s32 1, %s6
  %s9 = scalar_select 0, %s8, %s6
  $region1: #{tpu_custom_call.1} parent=0
    #allocation2 [shape = 'u8[8192]{0}', space=vmem, size = 0x2000, scoped, tag = 'input window, operand 0']
    #allocation3 [shape = 's32[2]{0}', space=sflag, size = 0x8, scoped, tag = 'scoped memory for tpu_custom_call.1']
    #allocation4 [shape = 's32[2]{0}', space=sflag, size = 0x8, scoped, tag = 'scoped memory for tpu_custom_call.1']
    #allocation5 [shape = 'u8[8192]{0}', space=vmem, size = 0x2000, scoped, tag = 'input window, operand 1']
    #allocation6 [shape = 's32[2]{0}', space=sflag, size = 0x8, scoped, tag = 'scoped memory for tpu_custom_call.1']
    #allocation7 [shape = 'u8[81920]{0}', space=vmem, size = 0x14000, scoped, tag = 'input window, operand 3, single buffered']
    #allocation8 [shape = 'u8[8192]{0}', space=vmem, size = 0x2000, scoped, tag = 'input window, operand 4, single buffered']
    #allocation9 [shape = 's32[1]{0}', space=sflag, size = 0x4, scoped, tag = 'scoped memory for tpu_custom_call.1']
    #allocation10 [shape = 'u8[8192]{0}', space=vmem, size = 0x2000, scoped, tag = 'output window, operand 0']
    %10 = vsyncpa [#allocation3], 0
    %s11 = scalar_lea.sflag [#allocation3], 1
    %12 = vsyncpa %s11, 0
    %13 = vsyncpa [#allocation6], 0
    %s14 = scalar_lea.sflag [#allocation6], 1
    %15 = vsyncpa %s14, 0
    %16 = vsyncpa [#allocation9], 0
    %17 = vsyncpa [#allocation4], 0
    %s18 = scalar_lea.sflag [#allocation4], 1
    %19 = vsyncpa %s18, 0
    loop: start=0, step=1, limit=4
    $region2: #{tpu_custom_call.1} parent=1 // loop_pre_header
      _
    $region3: #{tpu_custom_call.1} parent=1 // loop_header
      %s21 = sphi 0, %s25
      %p22 = scmp.ge.s32.totalorder %s21, 4
      %s31 = sphi 0, %s33
      %s34 = sphi 0, %s31
      %s35 = sphi 0, %s34
      %s51 = sphi 0, %s35
      %s57 = sphi 0, %s59
      %s60 = sphi 0, %s57
      %s61 = sphi 0, %s60
      %s77 = sphi 0, %s61
      %s83 = sphi 0, %s85
      %s86 = sphi 0, %s83
      %s87 = sphi 0, %s86
      %s103 = sphi 0, %s87
      %s107 = sphi 0, %s107
      %s109 = sphi 0, %s107
      %s110 = sphi 0, %s109
      %s124 = sphi 0, %s110
      %s128 = sphi 0, %s128
      %s130 = sphi 0, %s128
      %s131 = sphi 0, %s130
      %s145 = sphi 0, %s131
      %s151 = sphi 0, %s153
      %s154 = sphi 0, %s151
      %s155 = sphi 0, %s154
      %s171 = sphi 0, %s155
    $region4: #{tpu_custom_call.1} parent=1 // loop_header_branch
      %24 = sbr.rel (%p22) target = $region8
    $region5: #{tpu_custom_call.1} parent=1 // loop_body
      %s26 = ssub.s32 %s21, 1
      %s27 = ssub.s32 %s21, 2
      %s28 = sadd.s32 %s21, 1
      %s29 = ssub.s32 %s21, %s28
      %p30 = scmp.eq.s32.totalorder %s29, 0
      %s32 = sadd.s32 %s31, 1
      %s33 = scalar_select %p30, %s31, %s32
      %p36 = pneg %p30
      %p37 = scmp.eq.s32.totalorder %s21, 1
      %p38 = por %p36, %p37
      %p39 = scmp.ne.s32.totalorder %s31, %s34
      %p40 = scmp.eq.s32.totalorder %s21, 0
      %p41 = por %p39, %p40
      %p42 = scmp.ne.s32.totalorder %s31, %s34
      %p43 = scmp.eq.s32.totalorder %s26, 1
      %p44 = por %p42, %p43
      %p45 = scmp.ne.s32.totalorder %s34, %s35
      %p46 = scmp.eq.s32.totalorder %s26, 0
      %p47 = por %p45, %p46
      %p48 = scmp.ne.s32.totalorder %s34, %s35
      %p49 = scmp.eq.s32.totalorder %s27, 1
      %p50 = por %p48, %p49
      %p52 = scmp.ne.s32.totalorder %s35, %s51
      %p53 = scmp.eq.s32.totalorder %s27, 0
      %p54 = por %p52, %p53
      %s55 = ssub.s32 %s21, %s28
      %p56 = scmp.eq.s32.totalorder %s55, 0
      %s58 = sadd.s32 %s57, 1
      %s59 = scalar_select %p56, %s57, %s58
      %p62 = pneg %p56
      %p63 = scmp.eq.s32.totalorder %s21, 1
      %p64 = por %p62, %p63
      %p65 = scmp.ne.s32.totalorder %s57, %s60
      %p66 = scmp.eq.s32.totalorder %s21, 0
      %p67 = por %p65, %p66
      %p68 = scmp.ne.s32.totalorder %s57, %s60
      %p69 = scmp.eq.s32.totalorder %s26, 1
      %p70 = por %p68, %p69
      %p71 = scmp.ne.s32.totalorder %s60, %s61
      %p72 = scmp.eq.s32.totalorder %s26, 0
      %p73 = por %p71, %p72
      %p74 = scmp.ne.s32.totalorder %s60, %s61
      %p75 = scmp.eq.s32.totalorder %s27, 1
      %p76 = por %p74, %p75
      %p78 = scmp.ne.s32.totalorder %s61, %s77
      %p79 = scmp.eq.s32.totalorder %s27, 0
      %p80 = por %p78, %p79
      %s81 = ssub.s32 %s21, %s28
      %p82 = scmp.eq.s32.totalorder %s81, 0
      %s84 = sadd.s32 %s83, 1
      %s85 = scalar_select %p82, %s83, %s84
      %p88 = pneg %p82
      %p89 = scmp.eq.s32.totalorder %s21, 1
      %p90 = por %p88, %p89
      %p91 = scmp.ne.s32.totalorder %s83, %s86
      %p92 = scmp.eq.s32.totalorder %s21, 0
      %p93 = por %p91, %p92
      %p94 = scmp.ne.s32.totalorder %s83, %s86
      %p95 = scmp.eq.s32.totalorder %s26, 1
      %p96 = por %p94, %p95
      %p97 = scmp.ne.s32.totalorder %s86, %s87
      %p98 = scmp.eq.s32.totalorder %s26, 0
      %p99 = por %p97, %p98
      %p100 = scmp.ne.s32.totalorder %s86, %s87
      %p101 = scmp.eq.s32.totalorder %s27, 1
      %p102 = por %p100, %p101
      %p104 = scmp.ne.s32.totalorder %s87, %s103
      %p105 = scmp.eq.s32.totalorder %s27, 0
      %p106 = por %p104, %p105
      %s108 = sadd.s32 %s107, 1
      %p111 = scmp.eq.s32.totalorder %s21, 1
      %p112 = scmp.ne.s32.totalorder %s107, %s109
      %p113 = scmp.eq.s32.totalorder %s21, 0
      %p114 = por %p112, %p113
      %p115 = scmp.ne.s32.totalorder %s107, %s109
      %p116 = scmp.eq.s32.totalorder %s26, 1
      %p117 = por %p115, %p116
      %p118 = scmp.ne.s32.totalorder %s109, %s110
      %p119 = scmp.eq.s32.totalorder %s26, 0
      %p120 = por %p118, %p119
      %p121 = scmp.ne.s32.totalorder %s109, %s110
      %p122 = scmp.eq.s32.totalorder %s27, 1
      %p123 = por %p121, %p122
      %p125 = scmp.ne.s32.totalorder %s110, %s124
      %p126 = scmp.eq.s32.totalorder %s27, 0
      %p127 = por %p125, %p126
      %s129 = sadd.s32 %s128, 1
      %p132 = scmp.eq.s32.totalorder %s21, 1
      %p133 = scmp.ne.s32.totalorder %s128, %s130
      %p134 = scmp.eq.s32.totalorder %s21, 0
      %p135 = por %p133, %p134
      %p136 = scmp.ne.s32.totalorder %s128, %s130
      %p137 = scmp.eq.s32.totalorder %s26, 1
      %p138 = por %p136, %p137
      %p139 = scmp.ne.s32.totalorder %s130, %s131
      %p140 = scmp.eq.s32.totalorder %s26, 0
      %p141 = por %p139, %p140
      %p142 = scmp.ne.s32.totalorder %s130, %s131
      %p143 = scmp.eq.s32.totalorder %s27, 1
      %p144 = por %p142, %p143
      %p146 = scmp.ne.s32.totalorder %s131, %s145
      %p147 = scmp.eq.s32.totalorder %s27, 0
      %p148 = por %p146, %p147
      %s149 = ssub.s32 %s21, %s28
      %p150 = scmp.eq.s32.totalorder %s149, 0
      %s152 = sadd.s32 %s151, 1
      %s153 = scalar_select %p150, %s151, %s152
      %p156 = pneg %p150
      %p157 = scmp.eq.s32.totalorder %s21, 1
      %p158 = por %p156, %p157
      %p159 = scmp.ne.s32.totalorder %s151, %s154
      %p160 = scmp.eq.s32.totalorder %s21, 0
      %p161 = por %p159, %p160
      %p162 = scmp.ne.s32.totalorder %s151, %s154
      %p163 = scmp.eq.s32.totalorder %s26, 1
      %p164 = por %p162, %p163
      %p165 = scmp.ne.s32.totalorder %s154, %s155
      %p166 = scmp.eq.s32.totalorder %s26, 0
      %p167 = por %p165, %p166
      %p168 = scmp.ne.s32.totalorder %s154, %s155
      %p169 = scmp.eq.s32.totalorder %s27, 1
      %p170 = por %p168, %p169
      %p172 = scmp.ne.s32.totalorder %s155, %s171
      %p173 = scmp.eq.s32.totalorder %s27, 0
      %p174 = por %p172, %p173
      %p175 = scmp.le.s32.totalorder 1, %s21
      %p176 = scmp.lt.s32.totalorder %s21, 3
      %p177 = pnand %p175, %p176
      %p178 = pneg %p177
      // Predicated region
      $region9: #{tpu_custom_call.1} parent=5 // pred_check
        _
      $region10: #{tpu_custom_call.1} parent=5 // pred_check_branch
        %180 = sbr.rel (%p177) target = $region12
      $region11: #{tpu_custom_call.1} parent=5 // pred_region
        %s181 = ssub.s32 %s21, 1
        // Predicated region
        $region13: #{tpu_custom_call.1} parent=11 // pred_check
          %p182 = pneg %p120
        $region14: #{tpu_custom_call.1} parent=11 // pred_check_branch
          %184 = sbr.rel (%p182) target = $region16
        $region15: #{tpu_custom_call.1} parent=11 // pred_region
          %s186 = ssub.s32 2560, 2560
          %187 = vsyncadd [#allocation6], %s186
          %s188 = sshll.u32 [#allocation7], 4
          %s189 = int_to_ptr.vmem [resolvable:$true] %s188
          %194 = dma.hbm_to_vmem [thread:$0]  %s3, 2560, %s189, [#allocation6], 128, 128, 8
        $region16: #{tpu_custom_call.1} parent=11 // pred_fallthru
          _
        // Predicated region
        $region17: #{tpu_custom_call.1} parent=11 // pred_check
          %p195 = pneg %p141
        $region18: #{tpu_custom_call.1} parent=11 // pred_check_branch
          %197 = sbr.rel (%p195) target = $region20
        $region19: #{tpu_custom_call.1} parent=11 // pred_region
          %s199 = ssub.s32 256, 256
          %200 = vsyncadd [#allocation9], %s199
          %s201 = sshll.u32 [#allocation8], 4
          %s202 = int_to_ptr.vmem [resolvable:$true] %s201
          %207 = dma.hbm_to_vmem [thread:$0]  %s4, 256, %s202, [#allocation9], 128, 128, 8
        $region20: #{tpu_custom_call.1} parent=11 // pred_fallthru
          _
      $region12: #{tpu_custom_call.1} parent=5 // pred_fallthru
        _
      %p208 = scmp.lt.s32.totalorder %s21, 2
      // Predicated region
      $region21: #{tpu_custom_call.1} parent=5 // pred_check
        %p209 = pneg %p208
      $region22: #{tpu_custom_call.1} parent=5 // pred_check_branch
        %211 = sbr.rel (%p209) target = $region24
      $region23: #{tpu_custom_call.1} parent=5 // pred_region
        // Predicated region
        $region25: #{tpu_custom_call.1} parent=23 // pred_check
          %p212 = pneg %p41
        $region26: #{tpu_custom_call.1} parent=23 // pred_check_branch
          %214 = sbr.rel (%p212) target = $region28
        $region27: #{tpu_custom_call.1} parent=23 // pred_region
          %s215 = sand.u32 %s31, 1
          %s216 = scalar_lea.sflag [#allocation3], %s215
          %s217 = sand.u32 %s31, 1
          %s218 = smul.addr %s217, 8
          %s219 = scalar_lea.vmem [#allocation2], %s218
          %s221 = ssub.s32 128, 128
          %222 = vsyncadd %s216, %s221
          %s223 = smul.addr %s21, 128
          %s224 = scalar_lea.hbm %s0, %s223
          %s226 = sshll.u32 %s219, 4
          %s227 = int_to_ptr.vmem [resolvable:$true] %s226
          %229 = dma.hbm_to_vmem [thread:$0]  %s224, 128, %s227, %s216
        $region28: #{tpu_custom_call.1} parent=23 // pred_fallthru
          _
        // Predicated region
        $region29: #{tpu_custom_call.1} parent=23 // pred_check
          %p230 = pneg %p67
        $region30: #{tpu_custom_call.1} parent=23 // pred_check_branch
          %232 = sbr.rel (%p230) target = $region32
        $region31: #{tpu_custom_call.1} parent=23 // pred_region
          %s233 = sand.u32 %s21, 1
          %s234 = scalar_lea.sflag [#allocation6], %s233
          %s235 = sand.u32 %s57, 1
          %s236 = smul.addr %s235, 8
          %s237 = scalar_lea.vmem [#allocation5], %s236
          %s239 = ssub.s32 128, 128
          %240 = vsyncadd %s234, %s239
          %s241 = smul.addr %s21, 128
          %s242 = scalar_lea.hbm %s1, %s241
          %s244 = sshll.u32 %s237, 4
          %s245 = int_to_ptr.vmem [resolvable:$true] %s244
          %247 = dma.hbm_to_vmem [thread:$0]  %s242, 128, %s245, %s234
        $region32: #{tpu_custom_call.1} parent=23 // pred_fallthru
          _
        // Predicated region
        $region33: #{tpu_custom_call.1} parent=23 // pred_check
          %p248 = pneg %p93
        $region34: #{tpu_custom_call.1} parent=23 // pred_check_branch
          %250 = sbr.rel (%p248) target = $region36
        $region35: #{tpu_custom_call.1} parent=23 // pred_region
          %p251 = scmp.lt.s32.totalorder %s21, 1
          %s252 = scalar_select %p251, %s21, 1
          %s253 = scalar_lea.vmem %s2, %s252
        $region36: #{tpu_custom_call.1} parent=23 // pred_fallthru
          _
      $region24: #{tpu_custom_call.1} parent=5 // pred_fallthru
        _
      %p254 = scmp.le.s32.totalorder 1, %s21
      %p255 = scmp.lt.s32.totalorder %s21, 3
      %p256 = pnand %p254, %p255
      %p257 = pneg %p256
      // Predicated region
      $region37: #{tpu_custom_call.1} parent=5 // pred_check
        _
      $region38: #{tpu_custom_call.1} parent=5 // pred_check_branch
        %259 = sbr.rel (%p256) target = $region40
      $region39: #{tpu_custom_call.1} parent=5 // pred_region
        %s260 = ssub.s32 %s21, 1
        %s261 = sand.u32 %s34, 1
        %s262 = scalar_lea.sflag [#allocation3], %s261
        %s263 = sand.u32 %s34, 1
        %s264 = smul.addr %s263, 8
        %s265 = scalar_lea.vmem [#allocation2], %s264
        // Predicated region
        $region41: #{tpu_custom_call.1} parent=39 // pred_check
          %p266 = pneg %p47
        $region42: #{tpu_custom_call.1} parent=39 // pred_check_branch
          %268 = sbr.rel (%p266) target = $region44
        $region43: #{tpu_custom_call.1} parent=39 // pred_region
          %269 = dma.done %s262, 128
        $region44: #{tpu_custom_call.1} parent=39 // pred_fallthru
          _
        %s270 = sand.u32 %s26, 1
        %s271 = scalar_lea.sflag [#allocation6], %s270
        %s272 = sand.u32 %s60, 1
        %s273 = smul.addr %s272, 8
        %s274 = scalar_lea.vmem [#allocation5], %s273
        // Predicated region
        $region45: #{tpu_custom_call.1} parent=39 // pred_check
          %p275 = pneg %p73
        $region46: #{tpu_custom_call.1} parent=39 // pred_check_branch
          %277 = sbr.rel (%p275) target = $region48
        $region47: #{tpu_custom_call.1} parent=39 // pred_region
          %278 = dma.done %s271, 128
        $region48: #{tpu_custom_call.1} parent=39 // pred_fallthru
          _
        // Predicated region
        $region49: #{tpu_custom_call.1} parent=39 // pred_check
          %p279 = pneg %p120
        $region50: #{tpu_custom_call.1} parent=39 // pred_check_branch
          %281 = sbr.rel (%p279) target = $region52
        $region51: #{tpu_custom_call.1} parent=39 // pred_region
          %282 = dma.done [#allocation6], 2560
        $region52: #{tpu_custom_call.1} parent=39 // pred_fallthru
          _
        // Predicated region
        $region53: #{tpu_custom_call.1} parent=39 // pred_check
          %p283 = pneg %p141
        $region54: #{tpu_custom_call.1} parent=39 // pred_check_branch
          %285 = sbr.rel (%p283) target = $region56
        $region55: #{tpu_custom_call.1} parent=39 // pred_region
          %286 = dma.done [#allocation9], 256
        $region56: #{tpu_custom_call.1} parent=39 // pred_fallthru
          _
        %s287 = sand.u32 %s34, 1
        %s288 = scalar_lea.sflag [#allocation3], %s287
        %s289 = sand.u32 %s34, 1
        %s290 = smul.addr %s289, 8
        %s291 = scalar_lea.vmem [#allocation2], %s290
        %p292 = pneg %p47
        %p293 = pneg %p44
        %s294 = sand.u32 %s26, 1
        %s295 = scalar_lea.sflag [#allocation6], %s294
        %s296 = sand.u32 %s60, 1
        %s297 = smul.addr %s296, 8
        %s298 = scalar_lea.vmem [#allocation5], %s297
        %p299 = pneg %p73
        %p300 = pneg %p70
        %p301 = scmp.lt.s32.totalorder %s26, 1
        %s302 = scalar_select %p301, %s26, 1
        %s303 = scalar_lea.vmem %s2, %s302
        %p304 = pneg %p99
        %p305 = pneg %p96
        %p306 = pneg %p120
        %p307 = pneg %p117
        %p308 = pneg %p141
        %p309 = pneg %p138
        %p310 = pneg %p167
        %p311 = pneg %p164
        %s312 = sand.u32 %s154, 1
        %s313 = scalar_lea.sflag [#allocation4], %s312
        %s314 = sand.u32 %s154, 1
        %s315 = smul.addr %s314, 8
        %s316 = scalar_lea.vmem [#allocation10], %s315
        %p317 = scmp.lt.s32.totalorder %s26, 1
        %s318 = scalar_select %p317, %s26, 1
        %s319 = scalar_lea.vmem %s2, %s318
        %v320 = vld [vmem:[#allocation8 + $0x5] sm:$0x1]
        %v321 = vld [vmem:[#allocation8 + $0x6] sm:$0x1]
        %v322 = vld [vmem:[%s265] sm:$0xff]
        %vm323 = vcmask 261120
        %v324 = vsel %vm323, %v322, 0.0
        %325 = vadd.xlane.f32.xlu0 %v324
        %v326 = vpop.xlane.xlu0 %325
        %v327 = vrcp.pop 32.0
        %v328 = vmul.f32 %v326, %v327
        %v329 = vsub.f32 %v322, %v328
        %v330 = vmul.f32 %v329, %v329
        %v331 = vsel %vm323, %v330, 0.0
        %332 = vadd.xlane.f32.xlu0 %v331
        %v333 = vpop.xlane.xlu0 %332
        %v334 = vmul.f32 %v333, %v327
        %v335 = vadd.f32 %v334, 1e-05
        %v336 = vrsqrt.pop %v335
        %v337 = vmul.f32 %v329, %v336
        %v338 = vlaneseq
        %v339 = vshrl.u32 %v338, 7
        %v340 = vsub.s32 0, %v339
        %v341 = vrot.slane %v320, %v340
        %v342 = vmul.f32 %v337, %v341
        %v343 = vlaneseq
        %v344 = vshrl.u32 %v343, 7
        %v345 = vsub.s32 0, %v344
        %v346 = vrot.slane %v321, %v345
        %v347 = vadd.f32 %v342, %v346
        %v348 = vld [vmem:[%s274] sm:$0xff]
        %v349 = vsel %vm323, %v348, 0.0
        %350 = vadd.xlane.f32.xlu0 %v349
        %v351 = vpop.xlane.xlu0 %350
        %v352 = vmul.f32 %v351, %v327
        %v353 = vsub.f32 %v348, %v352
        %v354 = vmul.f32 %v353, %v353
        %v355 = vsel %vm323, %v354, 0.0
        %356 = vadd.xlane.f32.xlu0 %v355
        %v357 = vpop.xlane.xlu0 %356
        %v358 = vmul.f32 %v357, %v327
        %v359 = vadd.f32 %v358, 1e-05
        %v360 = vrsqrt.pop %v359
        %v361 = vmul.f32 %v353, %v360
        %v362 = vmul.f32 %v361, %v341
        %v363 = vadd.f32 %v362, %v346
        %v364 = vld [vmem:[#allocation7] sm:$0xff]
        %v365 = vld [vmem:[#allocation7 + $0x8] sm:$0xff]
        %v366 = vld [vmem:[#allocation7 + $0x10] sm:$0xff]
        %v367 = vld [vmem:[#allocation7 + $0x18] sm:$0xff]
        %v368 = vld [vmem:[#allocation8] sm:$0x1]
        %v369 = vlaneseq
        %v370 = vshrl.u32 %v369, 7
        %v371 = vsub.s32 0, %v370
        %v372 = vrot.slane %v368, %v371
        %v374 = vsel %vm323, %v347, 0
        %376 = vmatprep.subr.mxu0 0.0
        %377 = vmatpush1.msra.mxu0 %v364
        %378 = vmatprep.subr.mxu0 0.0
        %379 = vmatpush1.msra.mxu0 %v365
        %380 = vmatprep.subr.mxu0 0.0
        %381 = vmatpush1.msra.mxu0 %v366
        %382 = vmatprep.subr.mxu0 0.0
        %383 = vmatpush1.msra.mxu0 %v367
        %384 = vmatprep.subr.mxu0 0.0
        %385 = vmatpush1.msra.mxu0 0.0
        %386 = vmatprep.subr.mxu0 0.0
        %387 = vmatpush1.msra.mxu0 0.0
        %388 = vmatprep.subr.mxu0 0.0
        %389 = vmatpush1.msra.mxu0 0.0
        %390 = vmatprep.subr.mxu0 0.0
        %391 = vmatpush1.msra.mxu0 0.0
        %392 = vmatprep.subr.mxu0 0.0
        %393 = vmatpush1.msra.mxu0 0.0
        %394 = vmatprep.subr.mxu0 0.0
        %395 = vmatpush1.msra.mxu0 0.0
        %396 = vmatprep.subr.mxu0 0.0
        %397 = vmatpush1.msra.mxu0 0.0
        %398 = vmatprep.subr.mxu0 0.0
        %399 = vmatpush1.msra.mxu0 0.0
        %400 = vmatprep.subr.mxu0 0.0
        %401 = vmatpush1.msra.mxu0 0.0
        %402 = vmatprep.subr.mxu0 0.0
        %403 = vmatpush1.msra.mxu0 0.0
        %404 = vmatprep.subr.mxu0 0.0
        %405 = vmatpush1.msra.mxu0 0.0
        %406 = vmatprep.subr.mxu0 0.0
        %407 = vmatpush1.msra.mxu0 0.0
        %408 = vmatprep.subr.mxu0 0.0
        %409 = vmatpush1.msra.mxu0 0.0
        %410 = vmatprep.subr.mxu0 0.0
        %411 = vmatpush1.msra.mxu0 0.0
        %412 = vmatprep.subr.mxu0 0.0
        %413 = vmatpush1.msra.mxu0 0.0
        %414 = vmatprep.subr.mxu0 0.0
        %415 = vmatpush1.msra.mxu0 0.0
        %416 = vmatprep.subr.mxu0 0.0
        %417 = vmatpush1.msra.mxu0 0.0
        %418 = vmatprep.subr.mxu0 0.0
        %419 = vmatpush1.msra.mxu0 0.0
        %420 = vmatprep.subr.mxu0 0.0
        %421 = vmatpush1.msra.mxu0 0.0
        %422 = vmatprep.subr.mxu0 0.0
        %423 = vmatpush1.msra.mxu0 0.0
        %424 = vmatprep.subr.mxu0 0.0
        %425 = vmatpush1.msra.mxu0 0.0
        %426 = vmatprep.subr.mxu0 0.0
        %427 = vmatpush1.msra.mxu0 0.0
        %428 = vmatprep.subr.mxu0 0.0
        %429 = vmatpush1.msra.mxu0 0.0
        %430 = vmatprep.subr.mxu0 0.0
        %431 = vmatpush1.msra.mxu0 0.0
        %432 = vmatprep.subr.mxu0 0.0
        %433 = vmatpush1.msra.mxu0 0.0
        %434 = vmatprep.subr.mxu0 0.0
        %435 = vmatpush1.msra.mxu0 0.0
        %436 = vmatprep.subr.mxu0 0.0
        %437 = vmatpush1.msra.mxu0 0.0
        %438 = vmatprep.subr.mxu0 0.0
        %439 = vmatpush1.msra.mxu0 0.0
        %440 = vmatprep.mubr.f32.mxu0 0.0
        %441 = vmatmul.mubr.f32.gmra.mrb[0].mxu0 %v374
        %v442 = vpop.f32.mrb[0].mxu0
        %v443 = vadd.f32 %v372, %v442
        %v444 = vpop.f32.mrb[0].mxu0
        %445 = vdwg.mxu0
        %s446 = scalar_lea.vmem [#allocation7], 32
        %v447 = vld [vmem:[%s446] sm:$0xff]
        %v448 = vld [vmem:[%s446 + $0x8] sm:$0xff]
        %v449 = vld [vmem:[%s446 + $0x10] sm:$0xff]
        %v450 = vld [vmem:[%s446 + $0x18] sm:$0xff]
        %v451 = vld [vmem:[#allocation8 + $0x1] sm:$0x1]
        %v452 = vlaneseq
        %v453 = vshrl.u32 %v452, 7
        %v454 = vsub.s32 0, %v453
        %v455 = vrot.slane %v451, %v454
        %v457 = vsel %vm323, %v363, 0
        %459 = vmatprep.subr.mxu0 0.0
        %460 = vmatpush1.msra.mxu0 %v447
        %461 = vmatprep.subr.mxu0 0.0
        %462 = vmatpush1.msra.mxu0 %v448
        %463 = vmatprep.subr.mxu0 0.0
        %464 = vmatpush1.msra.mxu0 %v449
        %465 = vmatprep.subr.mxu0 0.0
        %466 = vmatpush1.msra.mxu0 %v450
        %467 = vmatprep.subr.mxu0 0.0
        %468 = vmatpush1.msra.mxu0 0.0
        %469 = vmatprep.subr.mxu0 0.0
        %470 = vmatpush1.msra.mxu0 0.0
        %471 = vmatprep.subr.mxu0 0.0
        %472 = vmatpush1.msra.mxu0 0.0
        %473 = vmatprep.subr.mxu0 0.0
        %474 = vmatpush1.msra.mxu0 0.0
        %475 = vmatprep.subr.mxu0 0.0
        %476 = vmatpush1.msra.mxu0 0.0
        %477 = vmatprep.subr.mxu0 0.0
        %478 = vmatpush1.msra.mxu0 0.0
        %479 = vmatprep.subr.mxu0 0.0
        %480 = vmatpush1.msra.mxu0 0.0
        %481 = vmatprep.subr.mxu0 0.0
        %482 = vmatpush1.msra.mxu0 0.0
        %483 = vmatprep.subr.mxu0 0.0
        %484 = vmatpush1.msra.mxu0 0.0
        %485 = vmatprep.subr.mxu0 0.0
        %486 = vmatpush1.msra.mxu0 0.0
        %487 = vmatprep.subr.mxu0 0.0
        %488 = vmatpush1.msra.mxu0 0.0
        %489 = vmatprep.subr.mxu0 0.0
        %490 = vmatpush1.msra.mxu0 0.0
        %491 = vmatprep.subr.mxu0 0.0
        %492 = vmatpush1.msra.mxu0 0.0
        %493 = vmatprep.subr.mxu0 0.0
        %494 = vmatpush1.msra.mxu0 0.0
        %495 = vmatprep.subr.mxu0 0.0
        %496 = vmatpush1.msra.mxu0 0.0
        %497 = vmatprep.subr.mxu0 0.0
        %498 = vmatpush1.msra.mxu0 0.0
        %499 = vmatprep.subr.mxu0 0.0
        %500 = vmatpush1.msra.mxu0 0.0
        %501 = vmatprep.subr.mxu0 0.0
        %502 = vmatpush1.msra.mxu0 0.0
        %503 = vmatprep.subr.mxu0 0.0
        %504 = vmatpush1.msra.mxu0 0.0
        %505 = vmatprep.subr.mxu0 0.0
        %506 = vmatpush1.msra.mxu0 0.0
        %507 = vmatprep.subr.mxu0 0.0
        %508 = vmatpush1.msra.mxu0 0.0
        %509 = vmatprep.subr.mxu0 0.0
        %510 = vmatpush1.msra.mxu0 0.0
        %511 = vmatprep.subr.mxu0 0.0
        %512 = vmatpush1.msra.mxu0 0.0
        %513 = vmatprep.subr.mxu0 0.0
        %514 = vmatpush1.msra.mxu0 0.0
        %515 = vmatprep.subr.mxu0 0.0
        %516 = vmatpush1.msra.mxu0 0.0
        %517 = vmatprep.subr.mxu0 0.0
        %518 = vmatpush1.msra.mxu0 0.0
        %519 = vmatprep.subr.mxu0 0.0
        %520 = vmatpush1.msra.mxu0 0.0
        %521 = vmatprep.subr.mxu0 0.0
        %522 = vmatpush1.msra.mxu0 0.0
        %523 = vmatprep.mubr.f32.mxu0 0.0
        %524 = vmatmul.mubr.f32.gmra.mrb[0].mxu0 %v457
        %v525 = vpop.f32.mrb[0].mxu0
        %v526 = vadd.f32 %v455, %v525
        %v527 = vpop.f32.mrb[0].mxu0
        %528 = vdwg.mxu0
        %s529 = scalar_lea.vmem [#allocation7], 64
        %v530 = vld [vmem:[%s529] sm:$0xff]
        %v531 = vld [vmem:[%s529 + $0x8] sm:$0xff]
        %v532 = vld [vmem:[%s529 + $0x10] sm:$0xff]
        %v533 = vld [vmem:[%s529 + $0x18] sm:$0xff]
        %v534 = vld [vmem:[#allocation8 + $0x2] sm:$0x1]
        %v535 = vlaneseq
        %v536 = vshrl.u32 %v535, 7
        %v537 = vsub.s32 0, %v536
        %v538 = vrot.slane %v534, %v537
        %539 = vmatprep.subr.mxu0 0.0
        %540 = vmatpush1.msra.mxu0 %v530
        %541 = vmatprep.subr.mxu0 0.0
        %542 = vmatpush1.msra.mxu0 %v531
        %543 = vmatprep.subr.mxu0 0.0
        %544 = vmatpush1.msra.mxu0 %v532
        %545 = vmatprep.subr.mxu0 0.0
        %546 = vmatpush1.msra.mxu0 %v533
        %547 = vmatprep.subr.mxu0 0.0
        %548 = vmatpush1.msra.mxu0 0.0
        %549 = vmatprep.subr.mxu0 0.0
        %550 = vmatpush1.msra.mxu0 0.0
        %551 = vmatprep.subr.mxu0 0.0
        %552 = vmatpush1.msra.mxu0 0.0
        %553 = vmatprep.subr.mxu0 0.0
        %554 = vmatpush1.msra.mxu0 0.0
        %555 = vmatprep.subr.mxu0 0.0
        %556 = vmatpush1.msra.mxu0 0.0
        %557 = vmatprep.subr.mxu0 0.0
        %558 = vmatpush1.msra.mxu0 0.0
        %559 = vmatprep.subr.mxu0 0.0
        %560 = vmatpush1.msra.mxu0 0.0
        %561 = vmatprep.subr.mxu0 0.0
        %562 = vmatpush1.msra.mxu0 0.0
        %563 = vmatprep.subr.mxu0 0.0
        %564 = vmatpush1.msra.mxu0 0.0
        %565 = vmatprep.subr.mxu0 0.0
        %566 = vmatpush1.msra.mxu0 0.0
        %567 = vmatprep.subr.mxu0 0.0
        %568 = vmatpush1.msra.mxu0 0.0
        %569 = vmatprep.subr.mxu0 0.0
        %570 = vmatpush1.msra.mxu0 0.0
        %571 = vmatprep.subr.mxu0 0.0
        %572 = vmatpush1.msra.mxu0 0.0
        %573 = vmatprep.subr.mxu0 0.0
        %574 = vmatpush1.msra.mxu0 0.0
        %575 = vmatprep.subr.mxu0 0.0
        %576 = vmatpush1.msra.mxu0 0.0
        %577 = vmatprep.subr.mxu0 0.0
        %578 = vmatpush1.msra.mxu0 0.0
        %579 = vmatprep.subr.mxu0 0.0
        %580 = vmatpush1.msra.mxu0 0.0
        %581 = vmatprep.subr.mxu0 0.0
        %582 = vmatpush1.msra.mxu0 0.0
        %583 = vmatprep.subr.mxu0 0.0
        %584 = vmatpush1.msra.mxu0 0.0
        %585 = vmatprep.subr.mxu0 0.0
        %586 = vmatpush1.msra.mxu0 0.0
        %587 = vmatprep.subr.mxu0 0.0
        %588 = vmatpush1.msra.mxu0 0.0
        %589 = vmatprep.subr.mxu0 0.0
        %590 = vmatpush1.msra.mxu0 0.0
        %591 = vmatprep.subr.mxu0 0.0
        %592 = vmatpush1.msra.mxu0 0.0
        %593 = vmatprep.subr.mxu0 0.0
        %594 = vmatpush1.msra.mxu0 0.0
        %595 = vmatprep.subr.mxu0 0.0
        %596 = vmatpush1.msra.mxu0 0.0
        %597 = vmatprep.subr.mxu0 0.0
        %598 = vmatpush1.msra.mxu0 0.0
        %599 = vmatprep.subr.mxu0 0.0
        %600 = vmatpush1.msra.mxu0 0.0
        %601 = vmatprep.subr.mxu0 0.0
        %602 = vmatpush1.msra.mxu0 0.0
        %603 = vmatprep.mubr.f32.mxu0 0.0
        %604 = vmatmul.mubr.f32.gmra.mrb[0].mxu0 %v457
        %v605 = vpop.f32.mrb[0].mxu0
        %v606 = vadd.f32 %v538, %v605
        %v607 = vpop.f32.mrb[0].mxu0
        %608 = vdwg.mxu0
        %v610 = vsel %vm323, %v526, 0
        %v613 = vsel %vm323, %v443, 0
        %615 = vmatprep.subr.mxu0 0.0
        %616 = vmatpush1.xpose.msra.mxu0 %v613
        %617 = vmatprep.subr.mxu0 0.0
        %618 = vmatpush1.xpose.msra.mxu0 0.0
        %619 = vmatprep.subr.mxu0 0.0
        %620 = vmatpush1.xpose.msra.mxu0 0.0
        %621 = vmatprep.subr.mxu0 0.0
        %622 = vmatpush1.xpose.msra.mxu0 0.0
        %623 = vmatprep.subr.mxu0 0.0
        %624 = vmatpush1.xpose.msra.mxu0 0.0
        %625 = vmatprep.subr.mxu0 0.0
        %626 = vmatpush1.xpose.msra.mxu0 0.0
        %627 = vmatprep.subr.mxu0 0.0
        %628 = vmatpush1.xpose.msra.mxu0 0.0
        %629 = vmatprep.subr.mxu0 0.0
        %630 = vmatpush1.xpose.msra.mxu0 0.0
        %631 = vmatprep.subr.mxu0 0.0
        %632 = vmatpush1.xpose.msra.mxu0 0.0
        %633 = vmatprep.subr.mxu0 0.0
        %634 = vmatpush1.xpose.msra.mxu0 0.0
        %635 = vmatprep.subr.mxu0 0.0
        %636 = vmatpush1.xpose.msra.mxu0 0.0
        %637 = vmatprep.subr.mxu0 0.0
        %638 = vmatpush1.xpose.msra.mxu0 0.0
        %639 = vmatprep.subr.mxu0 0.0
        %640 = vmatpush1.xpose.msra.mxu0 0.0
        %641 = vmatprep.subr.mxu0 0.0
        %642 = vmatpush1.xpose.msra.mxu0 0.0
        %643 = vmatprep.subr.mxu0 0.0
        %644 = vmatpush1.xpose.msra.mxu0 0.0
        %645 = vmatprep.subr.mxu0 0.0
        %646 = vmatpush1.xpose.msra.mxu0 0.0
        %647 = vmatprep.subr.mxu0 0.0
        %648 = vmatpush1.xpose.msra.mxu0 0.0
        %649 = vmatprep.subr.mxu0 0.0
        %650 = vmatpush1.xpose.msra.mxu0 0.0
        %651 = vmatprep.subr.mxu0 0.0
        %652 = vmatpush1.xpose.msra.mxu0 0.0
        %653 = vmatprep.subr.mxu0 0.0
        %654 = vmatpush1.xpose.msra.mxu0 0.0
        %655 = vmatprep.subr.mxu0 0.0
        %656 = vmatpush1.xpose.msra.mxu0 0.0
        %657 = vmatprep.subr.mxu0 0.0
        %658 = vmatpush1.xpose.msra.mxu0 0.0
        %659 = vmatprep.subr.mxu0 0.0
        %660 = vmatpush1.xpose.msra.mxu0 0.0
        %661 = vmatprep.subr.mxu0 0.0
        %662 = vmatpush1.xpose.msra.mxu0 0.0
        %663 = vmatprep.subr.mxu0 0.0
        %664 = vmatpush1.xpose.msra.mxu0 0.0
        %665 = vmatprep.subr.mxu0 0.0
        %666 = vmatpush1.xpose.msra.mxu0 0.0
        %667 = vmatprep.subr.mxu0 0.0
        %668 = vmatpush1.xpose.msra.mxu0 0.0
        %669 = vmatprep.subr.mxu0 0.0
        %670 = vmatpush1.xpose.msra.mxu0 0.0
        %671 = vmatprep.subr.mxu0 0.0
        %672 = vmatpush1.xpose.msra.mxu0 0.0
        %673 = vmatprep.subr.mxu0 0.0
        %674 = vmatpush1.xpose.msra.mxu0 0.0
        %675 = vmatprep.subr.mxu0 0.0
        %676 = vmatpush1.xpose.msra.mxu0 0.0
        %677 = vmatprep.subr.mxu0 0.0
        %678 = vmatpush1.xpose.msra.mxu0 0.0
        %679 = vmatprep.mubr.f32.mxu0 0.0
        %680 = vmatmul.mubr.f32.gmra.mrb[0].mxu0 %v610
        %v681 = vpop.f32.mrb[0].mxu0
        %v682 = vadd.f32 0.0, %v681
        %v683 = vpop.f32.mrb[0].mxu0
        %684 = vdwg.mxu0
        %vm685 = vcmask 64512
        %v686 = vsel %vm685, %v682, -inf
        %687 = vmax.xlane.f32.xlu0 %v686
        %v688 = vpop.xlane.xlu0 %687
        %v689 = vsub.f32 %v682, %v688
        %v690 = vmul.f32 %v689, 1.442695
        %v691 = vpow.pop %v690
        %v692 = vsel %vm685, %v691, 0.0
        %693 = vadd.xlane.f32.xlu0 %v692
        %v694 = vpop.xlane.xlu0 %693
        %v695 = vld [vmem:[%s319] sm:$0x1]
        %v697 = vlaneseq
        %v698 = vshrl.u32 %v697, 7
        %v699 = vsub.s32 0, %v698
        %v700 = vrot.slane %v695, %v699
        %v702 = vmul.f32 %v691, %v700
        %v703 = vsel %vm685, %v702, 0.0
        %704 = vadd.xlane.f32.xlu0 %v703
        %v705 = vpop.xlane.xlu0 %704
        %v706 = vrcp.pop %v694
        %v707 = vmul.f32 %v705, %v706
        %v708 = vmul.f32 %v606, %v707
        %s709 = scalar_lea.vmem [#allocation7], 96
        %v710 = vld [vmem:[%s709] sm:$0xff]
        %v711 = vld [vmem:[%s709 + $0x8] sm:$0xff]
        %v712 = vld [vmem:[%s709 + $0x10] sm:$0xff]
        %v713 = vld [vmem:[%s709 + $0x18] sm:$0xff]
        %v714 = vld [vmem:[#allocation8 + $0x3] sm:$0x1]
        %v715 = vlaneseq
        %v716 = vshrl.u32 %v715, 7
        %v717 = vsub.s32 0, %v716
        %v718 = vrot.slane %v714, %v717
        %v720 = vsel %vm323, %v708, 0
        %722 = vmatprep.subr.mxu0 0.0
        %723 = vmatpush1.msra.mxu0 %v710
        %724 = vmatprep.subr.mxu0 0.0
        %725 = vmatpush1.msra.mxu0 %v711
        %726 = vmatprep.subr.mxu0 0.0
        %727 = vmatpush1.msra.mxu0 %v712
        %728 = vmatprep.subr.mxu0 0.0
        %729 = vmatpush1.msra.mxu0 %v713
        %730 = vmatprep.subr.mxu0 0.0
        %731 = vmatpush1.msra.mxu0 0.0
        %732 = vmatprep.subr.mxu0 0.0
        %733 = vmatpush1.msra.mxu0 0.0
        %734 = vmatprep.subr.mxu0 0.0
        %735 = vmatpush1.msra.mxu0 0.0
        %736 = vmatprep.subr.mxu0 0.0
        %737 = vmatpush1.msra.mxu0 0.0
        %738 = vmatprep.subr.mxu0 0.0
        %739 = vmatpush1.msra.mxu0 0.0
        %740 = vmatprep.subr.mxu0 0.0
        %741 = vmatpush1.msra.mxu0 0.0
        %742 = vmatprep.subr.mxu0 0.0
        %743 = vmatpush1.msra.mxu0 0.0
        %744 = vmatprep.subr.mxu0 0.0
        %745 = vmatpush1.msra.mxu0 0.0
        %746 = vmatprep.subr.mxu0 0.0
        %747 = vmatpush1.msra.mxu0 0.0
        %748 = vmatprep.subr.mxu0 0.0
        %749 = vmatpush1.msra.mxu0 0.0
        %750 = vmatprep.subr.mxu0 0.0
        %751 = vmatpush1.msra.mxu0 0.0
        %752 = vmatprep.subr.mxu0 0.0
        %753 = vmatpush1.msra.mxu0 0.0
        %754 = vmatprep.subr.mxu0 0.0
        %755 = vmatpush1.msra.mxu0 0.0
        %756 = vmatprep.subr.mxu0 0.0
        %757 = vmatpush1.msra.mxu0 0.0
        %758 = vmatprep.subr.mxu0 0.0
        %759 = vmatpush1.msra.mxu0 0.0
        %760 = vmatprep.subr.mxu0 0.0
        %761 = vmatpush1.msra.mxu0 0.0
        %762 = vmatprep.subr.mxu0 0.0
        %763 = vmatpush1.msra.mxu0 0.0
        %764 = vmatprep.subr.mxu0 0.0
        %765 = vmatpush1.msra.mxu0 0.0
        %766 = vmatprep.subr.mxu0 0.0
        %767 = vmatpush1.msra.mxu0 0.0
        %768 = vmatprep.subr.mxu0 0.0
        %769 = vmatpush1.msra.mxu0 0.0
        %770 = vmatprep.subr.mxu0 0.0
        %771 = vmatpush1.msra.mxu0 0.0
        %772 = vmatprep.subr.mxu0 0.0
        %773 = vmatpush1.msra.mxu0 0.0
        %774 = vmatprep.subr.mxu0 0.0
        %775 = vmatpush1.msra.mxu0 0.0
        %776 = vmatprep.subr.mxu0 0.0
        %777 = vmatpush1.msra.mxu0 0.0
        %778 = vmatprep.subr.mxu0 0.0
        %779 = vmatpush1.msra.mxu0 0.0
        %780 = vmatprep.subr.mxu0 0.0
        %781 = vmatpush1.msra.mxu0 0.0
        %782 = vmatprep.subr.mxu0 0.0
        %783 = vmatpush1.msra.mxu0 0.0
        %784 = vmatprep.subr.mxu0 0.0
        %785 = vmatpush1.msra.mxu0 0.0
        %786 = vmatprep.mubr.f32.mxu0 0.0
        %787 = vmatmul.mubr.f32.gmra.mrb[0].mxu0 %v720
        %v788 = vpop.f32.mrb[0].mxu0
        %v789 = vadd.f32 %v718, %v788
        %v790 = vpop.f32.mrb[0].mxu0
        %791 = vdwg.mxu0
        %v792 = vld [vmem:[#allocation8 + $0x7] sm:$0x1]
        %v793 = vld [vmem:[#allocation8 + $0x8] sm:$0x1]
        %v794 = vsel %vm323, %v789, 0.0
        %795 = vadd.xlane.f32.xlu0 %v794
        %v796 = vpop.xlane.xlu0 %795
        %v797 = vmul.f32 %v796, %v327
        %v798 = vsub.f32 %v789, %v797
        %v799 = vmul.f32 %v798, %v798
        %v800 = vsel %vm323, %v799, 0.0
        %801 = vadd.xlane.f32.xlu0 %v800
        %v802 = vpop.xlane.xlu0 %801
        %v803 = vmul.f32 %v802, %v327
        %v804 = vadd.f32 %v803, 1e-05
        %v805 = vrsqrt.pop %v804
        %v806 = vmul.f32 %v798, %v805
        %v807 = vlaneseq
        %v808 = vshrl.u32 %v807, 7
        %v809 = vsub.s32 0, %v808
        %v810 = vrot.slane %v792, %v809
        %v811 = vmul.f32 %v806, %v810
        %v812 = vlaneseq
        %v813 = vshrl.u32 %v812, 7
        %v814 = vsub.s32 0, %v813
        %v815 = vrot.slane %v793, %v814
        %v816 = vadd.f32 %v811, %v815
        %s817 = scalar_lea.vmem [#allocation7], 128
        %v818 = vld [vmem:[%s817] sm:$0xff]
        %v819 = vld [vmem:[%s817 + $0x8] sm:$0xff]
        %v820 = vld [vmem:[%s817 + $0x10] sm:$0xff]
        %v821 = vld [vmem:[%s817 + $0x18] sm:$0xff]
        %v822 = vld [vmem:[#allocation8 + $0x4] sm:$0x1]
        %v823 = vlaneseq
        %v824 = vshrl.u32 %v823, 7
        %v825 = vsub.s32 0, %v824
        %v826 = vrot.slane %v822, %v825
        %v828 = vsel %vm323, %v816, 0
        %830 = vmatprep.subr.mxu0 0.0
        %831 = vmatpush1.msra.mxu0 %v818
        %832 = vmatprep.subr.mxu0 0.0
        %833 = vmatpush1.msra.mxu0 %v819
        %834 = vmatprep.subr.mxu0 0.0
        %835 = vmatpush1.msra.mxu0 %v820
        %836 = vmatprep.subr.mxu0 0.0
        %837 = vmatpush1.msra.mxu0 %v821
        %838 = vmatprep.subr.mxu0 0.0
        %839 = vmatpush1.msra.mxu0 0.0
        %840 = vmatprep.subr.mxu0 0.0
        %841 = vmatpush1.msra.mxu0 0.0
        %842 = vmatprep.subr.mxu0 0.0
        %843 = vmatpush1.msra.mxu0 0.0
        %844 = vmatprep.subr.mxu0 0.0
        %845 = vmatpush1.msra.mxu0 0.0
        %846 = vmatprep.subr.mxu0 0.0
        %847 = vmatpush1.msra.mxu0 0.0
        %848 = vmatprep.subr.mxu0 0.0
        %849 = vmatpush1.msra.mxu0 0.0
        %850 = vmatprep.subr.mxu0 0.0
        %851 = vmatpush1.msra.mxu0 0.0
        %852 = vmatprep.subr.mxu0 0.0
        %853 = vmatpush1.msra.mxu0 0.0
        %854 = vmatprep.subr.mxu0 0.0
        %855 = vmatpush1.msra.mxu0 0.0
        %856 = vmatprep.subr.mxu0 0.0
        %857 = vmatpush1.msra.mxu0 0.0
        %858 = vmatprep.subr.mxu0 0.0
        %859 = vmatpush1.msra.mxu0 0.0
        %860 = vmatprep.subr.mxu0 0.0
        %861 = vmatpush1.msra.mxu0 0.0
        %862 = vmatprep.subr.mxu0 0.0
        %863 = vmatpush1.msra.mxu0 0.0
        %864 = vmatprep.subr.mxu0 0.0
        %865 = vmatpush1.msra.mxu0 0.0
        %866 = vmatprep.subr.mxu0 0.0
        %867 = vmatpush1.msra.mxu0 0.0
        %868 = vmatprep.subr.mxu0 0.0
        %869 = vmatpush1.msra.mxu0 0.0
        %870 = vmatprep.subr.mxu0 0.0
        %871 = vmatpush1.msra.mxu0 0.0
        %872 = vmatprep.subr.mxu0 0.0
        %873 = vmatpush1.msra.mxu0 0.0
        %874 = vmatprep.subr.mxu0 0.0
        %875 = vmatpush1.msra.mxu0 0.0
        %876 = vmatprep.subr.mxu0 0.0
        %877 = vmatpush1.msra.mxu0 0.0
        %878 = vmatprep.subr.mxu0 0.0
        %879 = vmatpush1.msra.mxu0 0.0
        %880 = vmatprep.subr.mxu0 0.0
        %881 = vmatpush1.msra.mxu0 0.0
        %882 = vmatprep.subr.mxu0 0.0
        %883 = vmatpush1.msra.mxu0 0.0
        %884 = vmatprep.subr.mxu0 0.0
        %885 = vmatpush1.msra.mxu0 0.0
        %886 = vmatprep.subr.mxu0 0.0
        %887 = vmatpush1.msra.mxu0 0.0
        %888 = vmatprep.subr.mxu0 0.0
        %889 = vmatpush1.msra.mxu0 0.0
        %890 = vmatprep.subr.mxu0 0.0
        %891 = vmatpush1.msra.mxu0 0.0
        %892 = vmatprep.subr.mxu0 0.0
        %893 = vmatpush1.msra.mxu0 0.0
        %894 = vmatprep.mubr.f32.mxu0 0.0
        %895 = vmatmul.mubr.f32.gmra.mrb[0].mxu0 %v828
        %v896 = vpop.f32.mrb[0].mxu0
        %v897 = vadd.f32 %v826, %v896
        %v898 = vpop.f32.mrb[0].mxu0
        %899 = vdwg.mxu0
        %v900 = vadd.f32 %v816, %v897
        %v901 = vld [vmem:[#allocation8 + $0x9] sm:$0x1]
        %v902 = vld [vmem:[#allocation8 + $0xa] sm:$0x1]
        %v903 = vsel %vm323, %v900, 0.0
        %904 = vadd.xlane.f32.xlu0 %v903
        %v905 = vpop.xlane.xlu0 %904
        %v906 = vmul.f32 %v905, %v327
        %v907 = vsub.f32 %v900, %v906
        %v908 = vmul.f32 %v907, %v907
        %v909 = vsel %vm323, %v908, 0.0
        %910 = vadd.xlane.f32.xlu0 %v909
        %v911 = vpop.xlane.xlu0 %910
        %v912 = vmul.f32 %v911, %v327
        %v913 = vadd.f32 %v912, 1e-05
        %v914 = vrsqrt.pop %v913
        %v915 = vmul.f32 %v907, %v914
        %v916 = vlaneseq
        %v917 = vshrl.u32 %v916, 7
        %v918 = vsub.s32 0, %v917
        %v919 = vrot.slane %v901, %v918
        %v920 = vmul.f32 %v915, %v919
        %v921 = vlaneseq
        %v922 = vshrl.u32 %v921, 7
        %v923 = vsub.s32 0, %v922
        %v924 = vrot.slane %v902, %v923
        %v925 = vadd.f32 %v920, %v924
        %926 = vst.msk [vmem:[%s316] sm:$0xff] %vm323, %v925
        %s927 = sand.u32 %s154, 1
        %s928 = scalar_lea.sflag [#allocation4], %s927
        %s929 = sand.u32 %s154, 1
        %s930 = smul.addr %s929, 8
        %s931 = scalar_lea.vmem [#allocation10], %s930
        // Predicated region
        $region57: #{tpu_custom_call.1} parent=39 // pred_check
          %p932 = pneg %p164
        $region58: #{tpu_custom_call.1} parent=39 // pred_check_branch
          %934 = sbr.rel (%p932) target = $region60
        $region59: #{tpu_custom_call.1} parent=39 // pred_region
          %s936 = ssub.s32 128, 128
          %937 = vsyncadd %s928, %s936
          %s938 = smul.addr %s26, 128
          %s939 = scalar_lea.hbm %s5, %s938
          %s941 = sshll.u32 %s931, 4
          %s942 = int_to_ptr.vmem [resolvable:$true] %s941
          %944 = dma.vmem_to_hbm [thread:$0]  %s942, 128, %s939, %s928
        $region60: #{tpu_custom_call.1} parent=39 // pred_fallthru
          _
      $region40: #{tpu_custom_call.1} parent=5 // pred_fallthru
        _
      %p945 = scmp.le.s32.totalorder 2, %s21
      // Predicated region
      $region61: #{tpu_custom_call.1} parent=5 // pred_check
        %p946 = pneg %p945
      $region62: #{tpu_custom_call.1} parent=5 // pred_check_branch
        %948 = sbr.rel (%p946) target = $region64
      $region63: #{tpu_custom_call.1} parent=5 // pred_region
        %s949 = ssub.s32 %s21, 2
        // Predicated region
        $region65: #{tpu_custom_call.1} parent=63 // pred_check
          %p950 = pneg %p170
        $region66: #{tpu_custom_call.1} parent=63 // pred_check_branch
          %952 = sbr.rel (%p950) target = $region68
        $region67: #{tpu_custom_call.1} parent=63 // pred_region
          %s953 = sand.u32 %s155, 1
          %s954 = scalar_lea.sflag [#allocation4], %s953
          %s955 = sand.u32 %s155, 1
          %s956 = smul.addr %s955, 8
          %s957 = scalar_lea.vmem [#allocation10], %s956
          %958 = dma.done %s954, 128
        $region68: #{tpu_custom_call.1} parent=63 // pred_fallthru
          _
      $region64: #{tpu_custom_call.1} parent=5 // pred_fallthru
        _
    $region6: #{tpu_custom_call.1} parent=1 // loop_footer
      %s25 = sadd.s32 1, %s21
    $region7: #{tpu_custom_call.1} parent=1 // loop_footer_branch
      %20 = sbr.rel target = $region3
    $region8: #{tpu_custom_call.1} parent=1 // loop_exit
      _
    %959 = vsyncpa [#allocation3], 1
    %s960 = scalar_lea.sflag [#allocation3], 1
    %961 = vsyncpa %s960, 1
    %962 = vsyncpa [#allocation6], 1
    %s963 = scalar_lea.sflag [#allocation6], 1
    %964 = vsyncpa %s963, 1
    %965 = vsyncpa [#allocation9], 1
    %966 = vsyncpa [#allocation4], 1
    %s967 = scalar_lea.sflag [#allocation4], 1
    %968 = vsyncpa %s967, 1

</llo_original>
